<compile_context>
chip_gen: v7x
topology: tpu7x:2x2x1
jax: 0.10.0
libtpu: 0.0.40
codegen_flags: <defaults>
</compile_context>

<pallas_src>
import functools

import numpy as np
import jax
import jax.numpy as jnp
from jax.experimental import pallas as pl
from jax.experimental.pallas import tpu as pltpu

# Full-precision f32 contractions everywhere (kernel + reference) so the folded
# kernel can be validated against the direct formulation at 1e-5.
jax.config.update("jax_default_matmul_precision", "highest")


CFG = dict(
    latent_dimension=8,
    hidden_channels_vae=[4, 8],
    input_channels=1,
    output_size=16,
    padding=1,
    kernel_size=3,
    pooling_size=2,
    hidden_channels_dft=[32, 16],
    dx=0.1,
)

LANE = 128     # packed-blob / output-slab lane width
TILE_B = 8     # batch tile (f32 sublane multiple); use 128-512 for real batches


# ---------------------------------------------------------------------------
# The single fused kernel (one batch tile per grid step).
# Shapes per tile (TB=8): z(8,8) -> y(8,64) -> a1(8,32) -> a2(8,128 slab)
#                         y -> f2(8,16) -> f(8,128 slab, col 16)
# ---------------------------------------------------------------------------
def _fused_forward_kernel(z_ref, w_ref, out_ref, *, layout, dx, n_x):
    def ld(name):
        r0, nr, nc = layout[name]          # static python ints -> zero-cost view
        return w_ref[r0:r0 + nr, 0:nc]

    z = z_ref[...]

    # Front: decoder FC and DFT-MLP layer 1 share z -> one combined matmul + ReLU.
    y = jnp.maximum(
        jnp.dot(z, ld("wz"), preferred_element_type=jnp.float32) + ld("bz"), 0.0)

    # Decoder block 1 (upsample x2 + Conv1d 8->4 + ReLU) folded into one dense matmul.
    a1 = jnp.maximum(
        jnp.dot(y, ld("w1"), preferred_element_type=jnp.float32) + ld("b1"), 0.0)

    # Decoder block 2 (upsample x2 + Conv1d 4->1), output pre-scattered into
    # columns [0, n_x) of a 128-lane slab (remaining weight columns are zero).
    a2 = jnp.dot(a1, ld("w2"), preferred_element_type=jnp.float32) + ld("b2")

    # DecodeNorm tail: rho = softplus(a2); rho /= integral(rho) dx  (masked to
    # the n_x real columns of the slab).
    rho = jax.nn.softplus(a2)
    col = jax.lax.broadcasted_iota(jnp.int32, rho.shape, 1)
    xmask = col < n_x
    denom = jnp.sum(jnp.where(xmask, rho, 0.0), axis=-1, keepdims=True) * dx
    x_slab = jnp.where(xmask, rho * pl.reciprocal(denom, approx=False), 0.0)

    # DFT-MLP tail: hidden2 + ReLU, then the final linear whose single output
    # column is pre-scattered to slab column n_x (all other columns are zero).
    f2 = jnp.maximum(
        jnp.dot(y, ld("wd2"), preferred_element_type=jnp.float32) + ld("bd2"), 0.0)
    f_slab = jnp.dot(f2, ld("wd3"), preferred_element_type=jnp.float32) + ld("bd3")

    # One unmasked, lane-dense (TILE_B, 128) store.
    out_ref[...] = (x_slab + f_slab).astype(out_ref.dtype)


def forward(z, kp, *, dx, tile_b=TILE_B):
    """z (B, latent) -> (x_flat (B, n_x), f (B, 1)) via one batched pallas_call."""
    B, latent = z.shape
    n_x = kp["n_x"]
    blob = kp["blob"]

    b_pad = -(-B // tile_b) * tile_b
    if b_pad != B:
        z = jnp.pad(z, ((0, b_pad - B), (0, 0)))

    out = pl.pallas_call(
        functools.partial(_fused_forward_kernel,
                          layout=kp["layout"], dx=dx, n_x=n_x),
        out_shape=jax.ShapeDtypeStruct((b_pad, LANE), jnp.float32),
        grid=(b_pad // tile_b,),
        in_specs=[
            pl.BlockSpec((tile_b, latent), lambda i: (i, 0)),   # z batch tile
            pl.BlockSpec(blob.shape, lambda i: (0, 0)),         # weights, VMEM-resident
        ],
        out_specs=pl.BlockSpec((tile_b, LANE), lambda i: (i, 0)),
        compiler_params=pltpu.CompilerParams(
            dimension_semantics=("parallel",)),                 # dual-TC on v7x
    )(z, blob)

    x_flat = out[:B, :n_x]
    f = out[:B, n_x:n_x + 1]
    return x_flat, f


# ---------------------------------------------------------------------------
# Parameters: raw (PyTorch-equivalent layouts) + one-time host-side folding
# into the single packed, kernel-friendly weight blob.
# ---------------------------------------------------------------------------
def init_params(key, cfg):
    hc = cfg["hidden_channels_vae"]
    n_up = len(hc)
    init_size = cfg["output_size"] // (cfg["pooling_size"] ** n_up)
    assert init_size * cfg["pooling_size"] ** n_up == cfg["output_size"]
    c_last = hc[-1]

    keys = iter(jax.random.split(key, 16))
    p = {"_init_size": init_size}

    # DecodeNorm FC:  latent -> c_last * init_size  (NCW flattening)
    p["fc_w"] = 0.1 * jax.random.normal(
        next(keys), (cfg["latent_dimension"], c_last * init_size), jnp.float32)
    p["fc_b"] = 0.1 * jax.random.normal(next(keys), (c_last * init_size,), jnp.float32)

    # Decoder conv stack, weights in (K, Cin, Cout) layout.
    dec_channels = list(reversed(hc)) + [cfg["input_channels"]]   # e.g. [8, 4, 1]
    p["conv_w"], p["conv_b"] = [], []
    for cin, cout in zip(dec_channels[:-1], dec_channels[1:]):
        p["conv_w"].append(0.1 * jax.random.normal(
            next(keys), (cfg["kernel_size"], cin, cout), jnp.float32))
        p["conv_b"].append(0.1 * jax.random.normal(next(keys), (cout,), jnp.float32))

    # PredictionHead MLP: latent -> hidden... -> 1
    dims = [cfg["latent_dimension"]] + cfg["hidden_channels_dft"] + [1]
    p["dft_w"], p["dft_b"] = [], []
    for din, dout in zip(dims[:-1], dims[1:]):
        p["dft_w"].append(0.1 * jax.random.normal(next(keys), (din, dout), jnp.float32))
        p["dft_b"].append(0.1 * jax.random.normal(next(keys), (dout,), jnp.float32))
    return p


def _upsample_matrix(l_pre, c, factor):
    """Nearest-upsample on L as a dense matrix on channels-last flattening."""
    u = np.zeros((l_pre * c, l_pre * factor * c), np.float32)
    for l_up in range(l_pre * factor):
        for ch in range(c):
            u[(l_up // factor) * c + ch, l_up * c + ch] = 1.0
    return u


def _conv_matrix(w, length, pad):
    """'Same' Conv1d (stride 1, zero pad) as a dense Toeplitz-block matrix."""
    k, cin, cout = w.shape
    m = np.zeros((length * cin, length * cout), np.float32)
    for lo in range(length):
        for kk in range(k):
            li = lo + kk - pad
            if 0 <= li < length:
                m[li * cin:(li + 1) * cin, lo * cout:(lo + 1) * cout] += w[kk]
    return m


def prepare_kernel_params(p, cfg):
    """One-time host-side folding into a single (rows, 128) packed weight blob."""
    hc = cfg["hidden_channels_vae"]
    c_last, init_size = hc[-1], p["_init_size"]
    pool, pad = cfg["pooling_size"], cfg["padding"]

    fc_w, fc_b = np.asarray(p["fc_w"]), np.asarray(p["fc_b"])
    # PyTorch .view(B, C, L) NCW -> channels-last (L, C) flattening permutation.
    perm = np.arange(c_last * init_size).reshape(c_last, init_size).T.reshape(-1)
    fc_w_cl, fc_b_cl = fc_w[:, perm], fc_b[perm]

    # Fold each (upsample x pool, conv) block into one dense matrix + flat bias.
    dec_channels = list(reversed(hc)) + [cfg["input_channels"]]
    mats, biases = [], []
    length = init_size
    for i, cin in enumerate(dec_channels[:-1]):
        u = _upsample_matrix(length, cin, pool)
        length *= pool
        m = _conv_matrix(np.asarray(p["conv_w"][i]), length, pad)
        mats.append(u @ m)
        biases.append(np.tile(np.asarray(p["conv_b"][i]), length))

    dft_w = [np.asarray(w) for w in p["dft_w"]]
    dft_b = [np.asarray(b) for b in p["dft_b"]]

    n_dec = c_last * init_size          # decoder-FC half width of y
    n_dft1 = dft_w[0].shape[1]          # DFT-layer-1 half width of y
    n_x = mats[1].shape[1]              # decoder output width (= output_size * Cout)
    assert n_x + 1 <= LANE

    def widen(mat, bias, col0):
        """Scatter a matrix's output columns into a 128-wide slab (rest zero)."""
        wm = np.zeros((mat.shape[0], LANE), np.float32)
        wm[:, col0:col0 + mat.shape[1]] = mat
        wb = np.zeros((1, LANE), np.float32)
        wb[:, col0:col0 + mat.shape[1]] = bias
        return wm, wb

    w2w, b2w = widen(mats[1], biases[1], 0)          # decoder block 2 -> cols [0, n_x)
    wd3w, bd3w = widen(dft_w[2], dft_b[2], n_x)      # DFT output      -> col   n_x

    ops = [
        ("wz", np.concatenate([fc_w_cl, dft_w[0]], axis=1)),            # (8, 64)
        ("bz", np.concatenate([fc_b_cl, dft_b[0]])[None, :]),           # (1, 64)
        ("w1", np.concatenate(
            [mats[0], np.zeros((n_dft1, mats[0].shape[1]), np.float32)], axis=0)),
        ("b1", biases[0][None, :]),
        ("w2", w2w), ("b2", b2w),
        ("wd2", np.concatenate(
            [np.zeros((n_dec, dft_w[1].shape[1]), np.float32), dft_w[1]], axis=0)),
        ("bd2", dft_b[1][None, :]),
        ("wd3", wd3w), ("bd3", bd3w),
    ]

    # Pack into one lane-aligned blob; sublane-align every operand's row start.
    layout, rows = {}, 0
    for name, a in ops:
        rows = -(-rows // 8) * 8
        layout[name] = (rows, a.shape[0], a.shape[1])
        rows += a.shape[0]
    rows_pad = -(-rows // 8) * 8
    blob = np.zeros((rows_pad, LANE), np.float32)
    for name, a in ops:
        r0, nr, nc = layout[name]
        blob[r0:r0 + nr, :nc] = a

    # NOTE: for large batches on v6e/v7x, cast `blob` (and the in-kernel matmul
    # activations) to bf16 with f32 accumulation; kept f32 here for 1e-5 validation.
    return {"blob": jnp.asarray(blob), "layout": layout, "n_x": n_x}


# ---------------------------------------------------------------------------
# Pure-JAX reference (direct pad/repeat/conv formulation) for validation.
# ---------------------------------------------------------------------------
def forward_ref(z, p, cfg):
    B = z.shape[0]
    hc = cfg["hidden_channels_vae"]
    c_last, init_size = hc[-1], p["_init_size"]

    h = jnp.maximum(z @ p["fc_w"] + p["fc_b"], 0.0)
    x = jnp.transpose(h.reshape(B, c_last, init_size), (0, 2, 1))   # (B, L, C)

    n_blocks = len(p["conv_w"])
    for i in range(n_blocks):
        x = jnp.repeat(x, cfg["pooling_size"], axis=1)
        L = x.shape[1]
        xp = jnp.pad(x, ((0, 0), (cfg["padding"],) * 2, (0, 0)))
        w, b = p["conv_w"][i], p["conv_b"][i]
        out = sum(jnp.einsum("blc,co->blo", xp[:, k:k + L, :], w[k])
                  for k in range(w.shape[0])) + b
        x = jnp.maximum(out, 0.0) if i < n_blocks - 1 else out

    rho = jax.nn.softplus(x)
    rho = rho / (jnp.sum(rho, axis=1, keepdims=True) * cfg["dx"])
    x_flat = jnp.transpose(rho, (0, 2, 1)).reshape(B, -1)

    f = z
    n_lin = len(p["dft_w"])
    for i in range(n_lin):
        f = f @ p["dft_w"][i] + p["dft_b"][i]
        if i < n_lin - 1:
            f = jnp.maximum(f, 0.0)
    return x_flat, f


if __name__ == "__main__":
    key = jax.random.PRNGKey(0)
    k_param, k_z = jax.random.split(key)

    raw_params = init_params(k_param, CFG)
    kparams = prepare_kernel_params(raw_params, CFG)

    # Small batch that exercises batch padding (12 -> 16) and a 2-step grid.
    B = 12
    z = jax.random.normal(k_z, (B, CFG["latent_dimension"]), jnp.float32)

    x_flat, f = forward(z, kparams, dx=CFG["dx"])
    x_flat, f = jax.block_until_ready(x_flat), jax.block_until_ready(f)

    assert x_flat.shape == (B, CFG["input_channels"] * CFG["output_size"])
    assert f.shape == (B, 1)
    assert bool(jnp.all(jnp.isfinite(x_flat))) and bool(jnp.all(jnp.isfinite(f)))

    # Decoded densities must integrate to 1 (DecodeNorm normalization).
    integral = jnp.sum(x_flat, axis=-1) * CFG["dx"]
    assert bool(jnp.allclose(integral, 1.0, atol=1e-5))

    # Validate the fused/folded kernel against the direct pure-JAX reference.
    x_ref, f_ref = forward_ref(z, raw_params, CFG)
    assert bool(jnp.allclose(x_flat, x_ref, atol=1e-5, rtol=1e-5))
    assert bool(jnp.allclose(f, f_ref, atol=1e-5, rtol=1e-5))

    print("KERNEL_OK")
</pallas_src>

<mosaic_0001>
module attributes {stable_mosaic.version = 11 : i64} {
  func.func @_fused_forward_kernel(%arg0: i32, %arg1: memref<8x8xf32, #tpu.memory_space<vmem>>, %arg2: memref<224x128xf32, #tpu.memory_space<vmem>>, %arg3: memref<8x128xf32, #tpu.memory_space<vmem>>) attributes {dimension_semantics = [#tpu.dimension_semantics<parallel>], iteration_bounds = array<i64: 2>, scalar_prefetch = 0 : i64, scratch_operands = 0 : i64, tpu.core_type = #tpu.core_type<tc>, window_params = [{transform_indices = @transform_0, window_bounds = array<i64: 8, 8>}, {pipeline_mode = #tpu.pipeline_mode<synchronous>, transform_indices = @transform_1, window_bounds = array<i64: 224, 128>}, {transform_indices = @transform_2, window_bounds = array<i64: 8, 128>}]} {
    %c0 = arith.constant 0 : index
    %c0_0 = arith.constant 0 : index
    %0 = vector.load %arg1[%c0, %c0_0] : memref<8x8xf32, #tpu.memory_space<vmem>>, vector<8x8xf32>
    %c0_1 = arith.constant 0 : index
    %c0_2 = arith.constant 0 : index
    %1 = vector.load %arg2[%c0_1, %c0_2] : memref<224x128xf32, #tpu.memory_space<vmem>>, vector<8x64xf32>
    %cst = arith.constant dense<0.000000e+00> : vector<8x64xf32>
    %2 = tpu.matmul %0, %1, %cst {dimension_numbers = #tpu.dot_dimension_numbers<[1], [0], [0], [1], [0, 0, 1, 1], [], []>, precision = #tpu.contract_precision<fp32>} : vector<8x8xf32>, vector<8x64xf32>, vector<8x64xf32> -> vector<8x64xf32>
    %c8 = arith.constant 8 : index
    %c0_3 = arith.constant 0 : index
    %3 = vector.load %arg2[%c8, %c0_3] : memref<224x128xf32, #tpu.memory_space<vmem>>, vector<1x64xf32>
    %4 = vector.broadcast %3 : vector<1x64xf32> to vector<8x64xf32>
    %5 = arith.addf %2, %4 : vector<8x64xf32>
    %cst_4 = arith.constant 0.000000e+00 : f32
    %6 = vector.broadcast %cst_4 : f32 to vector<8x64xf32>
    %7 = arith.maximumf %5, %6 : vector<8x64xf32>
    %c16 = arith.constant 16 : index
    %c0_5 = arith.constant 0 : index
    %8 = vector.load %arg2[%c16, %c0_5] : memref<224x128xf32, #tpu.memory_space<vmem>>, vector<64x32xf32>
    %cst_6 = arith.constant dense<0.000000e+00> : vector<8x32xf32>
    %9 = tpu.matmul %7, %8, %cst_6 {dimension_numbers = #tpu.dot_dimension_numbers<[1], [0], [0], [1], [0, 0, 1, 1], [], []>, precision = #tpu.contract_precision<fp32>} : vector<8x64xf32>, vector<64x32xf32>, vector<8x32xf32> -> vector<8x32xf32>
    %c80 = arith.constant 80 : index
    %c0_7 = arith.constant 0 : index
    %10 = vector.load %arg2[%c80, %c0_7] : memref<224x128xf32, #tpu.memory_space<vmem>>, vector<1x32xf32>
    %11 = vector.broadcast %10 : vector<1x32xf32> to vector<8x32xf32>
    %12 = arith.addf %9, %11 : vector<8x32xf32>
    %cst_8 = arith.constant 0.000000e+00 : f32
    %13 = vector.broadcast %cst_8 : f32 to vector<8x32xf32>
    %14 = arith.maximumf %12, %13 : vector<8x32xf32>
    %c88 = arith.constant 88 : index
    %c0_9 = arith.constant 0 : index
    %15 = vector.load %arg2[%c88, %c0_9] : memref<224x128xf32, #tpu.memory_space<vmem>>, vector<32x128xf32>
    %cst_10 = arith.constant dense<0.000000e+00> : vector<8x128xf32>
    %16 = tpu.matmul %14, %15, %cst_10 {dimension_numbers = #tpu.dot_dimension_numbers<[1], [0], [0], [1], [0, 0, 1, 1], [], []>, precision = #tpu.contract_precision<fp32>} : vector<8x32xf32>, vector<32x128xf32>, vector<8x128xf32> -> vector<8x128xf32>
    %c120 = arith.constant 120 : index
    %c0_11 = arith.constant 0 : index
    %17 = vector.load %arg2[%c120, %c0_11] : memref<224x128xf32, #tpu.memory_space<vmem>>, vector<1x128xf32>
    %18 = vector.broadcast %17 : vector<1x128xf32> to vector<8x128xf32>
    %19 = arith.addf %16, %18 : vector<8x128xf32>
    %cst_12 = arith.constant 0.000000e+00 : f32
    %20 = vector.broadcast %cst_12 : f32 to vector<8x128xf32>
    %21 = arith.maximumf %19, %20 : vector<8x128xf32>
    %22 = vector.broadcast %cst_12 : f32 to vector<8x128xf32>
    %23 = arith.subf %19, %22 : vector<8x128xf32>
    %24 = arith.cmpf one, %23, %23 : vector<8x128xf32>
    %25 = vector.broadcast %cst_12 : f32 to vector<8x128xf32>
    %26 = arith.addf %19, %25 : vector<8x128xf32>
    %27 = math.absf %23 : vector<8x128xf32>
    %cst_13 = arith.constant 0.000000e+00 : f32
    %28 = vector.broadcast %cst_13 : f32 to vector<8x128xf32>
    %29 = arith.subf %28, %27 : vector<8x128xf32>
    %30 = math.exp %29 : vector<8x128xf32>
    %31 = math.log1p %30 : vector<8x128xf32>
    %32 = arith.addf %21, %31 : vector<8x128xf32>
    %33 = arith.select %24, %26, %32 : vector<8x128xi1>, vector<8x128xf32>
    %34 = tpu.iota {dimensions = array<i32: 1>} : vector<8x128xi32>
    %c16_i32 = arith.constant 16 : i32
    %35 = vector.broadcast %c16_i32 : i32 to vector<8x128xi32>
    %36 = arith.cmpi slt, %34, %35 : vector<8x128xi32>
    %cst_14 = arith.constant 0.000000e+00 : f32
    %37 = vector.broadcast %cst_14 : f32 to vector<8x128xf32>
    %38 = arith.select %36, %33, %37 : vector<8x128xi1>, vector<8x128xf32>
    %cst_15 = arith.constant dense<0.000000e+00> : vector<8xf32>
    %39 = vector.multi_reduction <add>, %38, %cst_15 [1] : vector<8x128xf32> to vector<8xf32>
    %40 = vector.shape_cast %39 : vector<8xf32> to vector<8x1xf32>
    %cst_16 = arith.constant 1.000000e-01 : f32
    %41 = vector.broadcast %cst_16 : f32 to vector<8x1xf32>
    %42 = arith.mulf %40, %41 : vector<8x1xf32>
    %43 = tpu.reciprocal %42 : vector<8x1xf32> -> vector<8x1xf32>
    %44 = vector.broadcast %43 : vector<8x1xf32> to vector<8x128xf32>
    %45 = arith.mulf %33, %44 : vector<8x128xf32>
    %cst_17 = arith.constant 0.000000e+00 : f32
    %46 = vector.broadcast %cst_17 : f32 to vector<8x128xf32>
    %47 = arith.select %36, %45, %46 : vector<8x128xi1>, vector<8x128xf32>
    %c128 = arith.constant 128 : index
    %c0_18 = arith.constant 0 : index
    %48 = vector.load %arg2[%c128, %c0_18] : memref<224x128xf32, #tpu.memory_space<vmem>>, vector<64x16xf32>
    %cst_19 = arith.constant dense<0.000000e+00> : vector<8x16xf32>
    %49 = tpu.matmul %7, %48, %cst_19 {dimension_numbers = #tpu.dot_dimension_numbers<[1], [0], [0], [1], [0, 0, 1, 1], [], []>, precision = #tpu.contract_precision<fp32>} : vector<8x64xf32>, vector<64x16xf32>, vector<8x16xf32> -> vector<8x16xf32>
    %c192 = arith.constant 192 : index
    %c0_20 = arith.constant 0 : index
    %50 = vector.load %arg2[%c192, %c0_20] : memref<224x128xf32, #tpu.memory_space<vmem>>, vector<1x16xf32>
    %51 = vector.broadcast %50 : vector<1x16xf32> to vector<8x16xf32>
    %52 = arith.addf %49, %51 : vector<8x16xf32>
    %cst_21 = arith.constant 0.000000e+00 : f32
    %53 = vector.broadcast %cst_21 : f32 to vector<8x16xf32>
    %54 = arith.maximumf %52, %53 : vector<8x16xf32>
    %c200 = arith.constant 200 : index
    %c0_22 = arith.constant 0 : index
    %55 = vector.load %arg2[%c200, %c0_22] : memref<224x128xf32, #tpu.memory_space<vmem>>, vector<16x128xf32>
    %cst_23 = arith.constant dense<0.000000e+00> : vector<8x128xf32>
    %56 = tpu.matmul %54, %55, %cst_23 {dimension_numbers = #tpu.dot_dimension_numbers<[1], [0], [0], [1], [0, 0, 1, 1], [], []>, precision = #tpu.contract_precision<fp32>} : vector<8x16xf32>, vector<16x128xf32>, vector<8x128xf32> -> vector<8x128xf32>
    %c216 = arith.constant 216 : index
    %c0_24 = arith.constant 0 : index
    %57 = vector.load %arg2[%c216, %c0_24] : memref<224x128xf32, #tpu.memory_space<vmem>>, vector<1x128xf32>
    %58 = vector.broadcast %57 : vector<1x128xf32> to vector<8x128xf32>
    %59 = arith.addf %56, %58 : vector<8x128xf32>
    %60 = arith.addf %47, %59 : vector<8x128xf32>
    %c0_25 = arith.constant 0 : index
    %c0_26 = arith.constant 0 : index
    %61 = vector.load %arg3[%c0_25, %c0_26] : memref<8x128xf32, #tpu.memory_space<vmem>>, vector<8x128xf32>
    tpu.vector_store %arg3[%c0_25, %c0_26], %60 {strides = array<i32>} : memref<8x128xf32, #tpu.memory_space<vmem>>, vector<8x128xf32>,
    return
  }
  func.func @transform_0(%arg0: i32) -> (i32, i32) {
    %c0_i32 = arith.constant 0 : i32
    %c0_i32_0 = arith.constant 0 : i32
    return %arg0, %c0_i32 : i32, i32
  }
  func.func @transform_1(%arg0: i32) -> (i32, i32) {
    %c0_i32 = arith.constant 0 : i32
    %c0_i32_0 = arith.constant 0 : i32
    %c0_i32_1 = arith.constant 0 : i32
    return %c0_i32, %c0_i32_0 : i32, i32
  }
  func.func @transform_2(%arg0: i32) -> (i32, i32) {
    %c0_i32 = arith.constant 0 : i32
    %c0_i32_0 = arith.constant 0 : i32
    return %arg0, %c0_i32 : i32, i32
  }
}

</mosaic_0001>

<llo_original>
// kernel: tpu_custom_call.1
$region0: #{tpu_custom_call.1}
  #allocation0 [shape = 'u32[]', space=smem, size = 0x4, offset = 0x4, fixed_abs, tag = 'smem constant byte address 0x4 - core index']
  #allocation1 [shape = 'u32[144,128]{1,0:T(1,128)}', space=vmem, size = 0x12000, scoped, tag = 'internal scratch']
  %s0 = inlined_call_operand.vmem [shape: f32[16,8], index: 0, kind: input, shape index: {}]
  %s1 = inlined_call_operand.hbm [shape: f32[224,128], index: 1, kind: input, shape index: {}]
  %s2 = inlined_call_operand.hbm [shape: f32[16,128], index: 2, kind: output, shape index: {}]
  %s3 = sld [smem:[#allocation0]]
  $region45: #{tpu_custom_call.1} parent=0
    _
  %s5 = ssub.s32 1, %s3
  %s6 = scalar_select 0, %s5, %s3
  $region1: #{tpu_custom_call.1} parent=0
    #allocation2 [shape = 'u8[114688]{0}', space=vmem, size = 0x1c000, scoped, tag = 'input window, operand 1, single buffered']
    #allocation3 [shape = 's32[2]{0}', space=sflag, size = 0x8, scoped, tag = 'scoped memory for tpu_custom_call.1']
    #allocation4 [shape = 's32[2]{0}', space=sflag, size = 0x8, scoped, tag = 'scoped memory for tpu_custom_call.1']
    #allocation5 [shape = 'u8[8192]{0}', space=vmem, size = 0x2000, scoped, tag = 'output window, operand 0']
    %7 = vsyncpa [#allocation3], 0
    %8 = vsyncpa [#allocation4], 0
    %s9 = scalar_lea.sflag [#allocation4], 1
    %10 = vsyncpa %s9, 0
    loop: start=0, step=1, limit=4
    $region2: #{tpu_custom_call.1} parent=1 // loop_pre_header
      _
    $region3: #{tpu_custom_call.1} parent=1 // loop_header
      %s12 = sphi 0, %s16
      %p13 = scmp.ge.s32.totalorder %s12, 4
      %s22 = sphi 0, %s24
      %s25 = sphi 0, %s22
      %s26 = sphi 0, %s25
      %s42 = sphi 0, %s26
      %s46 = sphi 0, %s46
      %s48 = sphi 0, %s46
      %s49 = sphi 0, %s48
      %s63 = sphi 0, %s49
      %s69 = sphi 0, %s71
      %s72 = sphi 0, %s69
      %s73 = sphi 0, %s72
      %s89 = sphi 0, %s73
    $region4: #{tpu_custom_call.1} parent=1 // loop_header_branch
      %15 = sbr.rel (%p13) target = $region8
    $region5: #{tpu_custom_call.1} parent=1 // loop_body
      %s17 = ssub.s32 %s12, 1
      %s18 = ssub.s32 %s12, 2
      %s19 = sadd.s32 %s12, 1
      %s20 = ssub.s32 %s12, %s19
      %p21 = scmp.eq.s32.totalorder %s20, 0
      %s23 = sadd.s32 %s22, 1
      %s24 = scalar_select %p21, %s22, %s23
      %p27 = pneg %p21
      %p28 = scmp.eq.s32.totalorder %s12, 1
      %p29 = por %p27, %p28
      %p30 = scmp.ne.s32.totalorder %s22, %s25
      %p31 = scmp.eq.s32.totalorder %s12, 0
      %p32 = por %p30, %p31
      %p33 = scmp.ne.s32.totalorder %s22, %s25
      %p34 = scmp.eq.s32.totalorder %s17, 1
      %p35 = por %p33, %p34
      %p36 = scmp.ne.s32.totalorder %s25, %s26
      %p37 = scmp.eq.s32.totalorder %s17, 0
      %p38 = por %p36, %p37
      %p39 = scmp.ne.s32.totalorder %s25, %s26
      %p40 = scmp.eq.s32.totalorder %s18, 1
      %p41 = por %p39, %p40
      %p43 = scmp.ne.s32.totalorder %s26, %s42
      %p44 = scmp.eq.s32.totalorder %s18, 0
      %p45 = por %p43, %p44
      %s47 = sadd.s32 %s46, 1
      %p50 = scmp.eq.s32.totalorder %s12, 1
      %p51 = scmp.ne.s32.totalorder %s46, %s48
      %p52 = scmp.eq.s32.totalorder %s12, 0
      %p53 = por %p51, %p52
      %p54 = scmp.ne.s32.totalorder %s46, %s48
      %p55 = scmp.eq.s32.totalorder %s17, 1
      %p56 = por %p54, %p55
      %p57 = scmp.ne.s32.totalorder %s48, %s49
      %p58 = scmp.eq.s32.totalorder %s17, 0
      %p59 = por %p57, %p58
      %p60 = scmp.ne.s32.totalorder %s48, %s49
      %p61 = scmp.eq.s32.totalorder %s18, 1
      %p62 = por %p60, %p61
      %p64 = scmp.ne.s32.totalorder %s49, %s63
      %p65 = scmp.eq.s32.totalorder %s18, 0
      %p66 = por %p64, %p65
      %s67 = ssub.s32 %s12, %s19
      %p68 = scmp.eq.s32.totalorder %s67, 0
      %s70 = sadd.s32 %s69, 1
      %s71 = scalar_select %p68, %s69, %s70
      %p74 = pneg %p68
      %p75 = scmp.eq.s32.totalorder %s12, 1
      %p76 = por %p74, %p75
      %p77 = scmp.ne.s32.totalorder %s69, %s72
      %p78 = scmp.eq.s32.totalorder %s12, 0
      %p79 = por %p77, %p78
      %p80 = scmp.ne.s32.totalorder %s69, %s72
      %p81 = scmp.eq.s32.totalorder %s17, 1
      %p82 = por %p80, %p81
      %p83 = scmp.ne.s32.totalorder %s72, %s73
      %p84 = scmp.eq.s32.totalorder %s17, 0
      %p85 = por %p83, %p84
      %p86 = scmp.ne.s32.totalorder %s72, %s73
      %p87 = scmp.eq.s32.totalorder %s18, 1
      %p88 = por %p86, %p87
      %p90 = scmp.ne.s32.totalorder %s73, %s89
      %p91 = scmp.eq.s32.totalorder %s18, 0
      %p92 = por %p90, %p91
      %p93 = scmp.le.s32.totalorder 1, %s12
      %p94 = scmp.lt.s32.totalorder %s12, 3
      %p95 = pnand %p93, %p94
      %p96 = pneg %p95
      // Predicated region
      $region9: #{tpu_custom_call.1} parent=5 // pred_check
        _
      $region10: #{tpu_custom_call.1} parent=5 // pred_check_branch
        %98 = sbr.rel (%p95) target = $region12
      $region11: #{tpu_custom_call.1} parent=5 // pred_region
        %s99 = ssub.s32 %s12, 1
        // Predicated region
        $region13: #{tpu_custom_call.1} parent=11 // pred_check
          %p100 = pneg %p59
        $region14: #{tpu_custom_call.1} parent=11 // pred_check_branch
          %102 = sbr.rel (%p100) target = $region16
        $region15: #{tpu_custom_call.1} parent=11 // pred_region
          %s104 = ssub.s32 3584, 3584
          %105 = vsyncadd [#allocation3], %s104
          %s106 = sshll.u32 [#allocation2], 4
          %s107 = int_to_ptr.vmem [resolvable:$true] %s106
          %112 = dma.hbm_to_vmem [thread:$0]  %s1, 3584, %s107, [#allocation3], 128, 128, 8
        $region16: #{tpu_custom_call.1} parent=11 // pred_fallthru
          _
      $region12: #{tpu_custom_call.1} parent=5 // pred_fallthru
        _
      %p113 = scmp.lt.s32.totalorder %s12, 2
      // Predicated region
      $region17: #{tpu_custom_call.1} parent=5 // pred_check
        %p114 = pneg %p113
      $region18: #{tpu_custom_call.1} parent=5 // pred_check_branch
        %116 = sbr.rel (%p114) target = $region20
      $region19: #{tpu_custom_call.1} parent=5 // pred_region
        // Predicated region
        $region21: #{tpu_custom_call.1} parent=19 // pred_check
          %p117 = pneg %p32
        $region22: #{tpu_custom_call.1} parent=19 // pred_check_branch
          %119 = sbr.rel (%p117) target = $region24
        $region23: #{tpu_custom_call.1} parent=19 // pred_region
          %p120 = scmp.lt.s32.totalorder %s12, 1
          %s121 = scalar_select %p120, %s12, 1
          %s122 = smul.addr %s121, 8
          %s123 = scalar_lea.vmem %s0, %s122
        $region24: #{tpu_custom_call.1} parent=19 // pred_fallthru
          _
      $region20: #{tpu_custom_call.1} parent=5 // pred_fallthru
        _
      %p124 = scmp.le.s32.totalorder 1, %s12
      %p125 = scmp.lt.s32.totalorder %s12, 3
      %p126 = pnand %p124, %p125
      %p127 = pneg %p126
      // Predicated region
      $region25: #{tpu_custom_call.1} parent=5 // pred_check
        _
      $region26: #{tpu_custom_call.1} parent=5 // pred_check_branch
        %129 = sbr.rel (%p126) target = $region28
      $region27: #{tpu_custom_call.1} parent=5 // pred_region
        %s130 = ssub.s32 %s12, 1
        // Predicated region
        $region29: #{tpu_custom_call.1} parent=27 // pred_check
          %p131 = pneg %p59
        $region30: #{tpu_custom_call.1} parent=27 // pred_check_branch
          %133 = sbr.rel (%p131) target = $region32
        $region31: #{tpu_custom_call.1} parent=27 // pred_region
          %134 = dma.done [#allocation3], 3584
        $region32: #{tpu_custom_call.1} parent=27 // pred_fallthru
          _
        %p135 = scmp.lt.s32.totalorder %s17, 1
        %s136 = scalar_select %p135, %s17, 1
        %s137 = smul.addr %s136, 8
        %s138 = scalar_lea.vmem %s0, %s137
        %p139 = pneg %p38
        %p140 = pneg %p35
        %p141 = pneg %p59
        %p142 = pneg %p56
        %p143 = pneg %p85
        %p144 = pneg %p82
        %s145 = sand.u32 %s72, 1
        %s146 = scalar_lea.sflag [#allocation4], %s145
        %s147 = sand.u32 %s72, 1
        %s148 = smul.addr %s147, 8
        %s149 = scalar_lea.vmem [#allocation5], %s148
        %p150 = scmp.lt.s32.totalorder %s17, 1
        %s151 = scalar_select %p150, %s17, 1
        %s152 = smul.addr %s151, 8
        %s153 = scalar_lea.vmem %s0, %s152
        %v154 = vld [vmem:[%s153] sm:$0xff]
        %v155 = vld [vmem:[#allocation2] sm:$0xff]
        %v156 = vld [vmem:[#allocation2 + $0x8] sm:$0x1]
        %v157 = vlaneseq
        %v158 = vshrl.u32 %v157, 7
        %v159 = vsub.s32 0, %v158
        %v160 = vrot.slane %v156, %v159
        %vm161 = vcmask 64512
        %v163 = vsel %vm161, %v154, 0
        %165 = vmatprep.subr.mxu0 0.0
        %v166 = vand.u32 %v155, 4294901760
        %167 = vmatpush1.msra.mxu0 %v166
        %168 = vmatprep.subr.mxu0 0.0
        %169 = vmatpush1.msra.mxu0 0.0
        %170 = vmatprep.subr.mxu0 0.0
        %171 = vmatpush1.msra.mxu0 0.0
        %172 = vmatprep.subr.mxu0 0.0
        %173 = vmatpush1.msra.mxu0 0.0
        %174 = vmatprep.subr.mxu0 0.0
        %175 = vmatpush1.msra.mxu0 0.0
        %176 = vmatprep.subr.mxu0 0.0
        %177 = vmatpush1.msra.mxu0 0.0
        %178 = vmatprep.subr.mxu0 0.0
        %179 = vmatpush1.msra.mxu0 0.0
        %180 = vmatprep.subr.mxu0 0.0
        %181 = vmatpush1.msra.mxu0 0.0
        %182 = vmatprep.subr.mxu0 0.0
        %183 = vmatpush1.msra.mxu0 0.0
        %184 = vmatprep.subr.mxu0 0.0
        %185 = vmatpush1.msra.mxu0 0.0
        %186 = vmatprep.subr.mxu0 0.0
        %187 = vmatpush1.msra.mxu0 0.0
        %188 = vmatprep.subr.mxu0 0.0
        %189 = vmatpush1.msra.mxu0 0.0
        %190 = vmatprep.subr.mxu0 0.0
        %191 = vmatpush1.msra.mxu0 0.0
        %192 = vmatprep.subr.mxu0 0.0
        %193 = vmatpush1.msra.mxu0 0.0
        %194 = vmatprep.subr.mxu0 0.0
        %195 = vmatpush1.msra.mxu0 0.0
        %196 = vmatprep.subr.mxu0 0.0
        %197 = vmatpush1.msra.mxu0 0.0
        %198 = vmatprep.subr.mxu0 0.0
        %199 = vmatpush1.msra.mxu0 0.0
        %200 = vmatprep.subr.mxu0 0.0
        %201 = vmatpush1.msra.mxu0 0.0
        %202 = vmatprep.subr.mxu0 0.0
        %203 = vmatpush1.msra.mxu0 0.0
        %204 = vmatprep.subr.mxu0 0.0
        %205 = vmatpush1.msra.mxu0 0.0
        %206 = vmatprep.subr.mxu0 0.0
        %207 = vmatpush1.msra.mxu0 0.0
        %208 = vmatprep.subr.mxu0 0.0
        %209 = vmatpush1.msra.mxu0 0.0
        %210 = vmatprep.subr.mxu0 0.0
        %211 = vmatpush1.msra.mxu0 0.0
        %212 = vmatprep.subr.mxu0 0.0
        %213 = vmatpush1.msra.mxu0 0.0
        %214 = vmatprep.subr.mxu0 0.0
        %215 = vmatpush1.msra.mxu0 0.0
        %216 = vmatprep.subr.mxu0 0.0
        %217 = vmatpush1.msra.mxu0 0.0
        %218 = vmatprep.subr.mxu0 0.0
        %219 = vmatpush1.msra.mxu0 0.0
        %220 = vmatprep.subr.mxu0 0.0
        %221 = vmatpush1.msra.mxu0 0.0
        %222 = vmatprep.subr.mxu0 0.0
        %223 = vmatpush1.msra.mxu0 0.0
        %224 = vmatprep.subr.mxu0 0.0
        %225 = vmatpush1.msra.mxu0 0.0
        %226 = vmatprep.subr.mxu0 0.0
        %227 = vmatpush1.msra.mxu0 0.0
        %228 = vmatprep.subr.mxu0 0.0
        %229 = vmatpush1.msra.mxu0 0.0
        %230 = vmatprep.mubr.f32.mxu0 0.0
        %v231 = vand.u32 %v163, 4294901760
        %v232 = vsub.f32 %v163, %v231
        %v233 = vand.u32 %v232, 4294901760
        %v234 = vsub.f32 %v232, %v233
        %v235 = vand.u32 %v234, 4294901760
        %236 = vmatmul.mubr.f32.gmra.mrb[0].mxu0 %v235
        %v237 = vpop.f32.mrb[0].mxu0
        %v238 = vadd.f32 %v160, %v237
        %v239 = vpop.f32.mrb[0].mxu0
        %240 = vdwg.mxu0
        %241 = vmatprep.subr.mxu0 0.0
        %v242 = vand.u32 %v155, 4294901760
        %v243 = vsub.f32 %v155, %v242
        %v244 = vand.u32 %v243, 4294901760
        %v245 = vsub.f32 %v243, %v244
        %v246 = vand.u32 %v245, 4294901760
        %247 = vmatpush1.msra.mxu0 %v246
        %248 = vmatprep.subr.mxu0 0.0
        %249 = vmatpush1.msra.mxu0 0.0
        %250 = vmatprep.subr.mxu0 0.0
        %251 = vmatpush1.msra.mxu0 0.0
        %252 = vmatprep.subr.mxu0 0.0
        %253 = vmatpush1.msra.mxu0 0.0
        %254 = vmatprep.subr.mxu0 0.0
        %255 = vmatpush1.msra.mxu0 0.0
        %256 = vmatprep.subr.mxu0 0.0
        %257 = vmatpush1.msra.mxu0 0.0
        %258 = vmatprep.subr.mxu0 0.0
        %259 = vmatpush1.msra.mxu0 0.0
        %260 = vmatprep.subr.mxu0 0.0
        %261 = vmatpush1.msra.mxu0 0.0
        %262 = vmatprep.subr.mxu0 0.0
        %263 = vmatpush1.msra.mxu0 0.0
        %264 = vmatprep.subr.mxu0 0.0
        %265 = vmatpush1.msra.mxu0 0.0
        %266 = vmatprep.subr.mxu0 0.0
        %267 = vmatpush1.msra.mxu0 0.0
        %268 = vmatprep.subr.mxu0 0.0
        %269 = vmatpush1.msra.mxu0 0.0
        %270 = vmatprep.subr.mxu0 0.0
        %271 = vmatpush1.msra.mxu0 0.0
        %272 = vmatprep.subr.mxu0 0.0
        %273 = vmatpush1.msra.mxu0 0.0
        %274 = vmatprep.subr.mxu0 0.0
        %275 = vmatpush1.msra.mxu0 0.0
        %276 = vmatprep.subr.mxu0 0.0
        %277 = vmatpush1.msra.mxu0 0.0
        %278 = vmatprep.subr.mxu0 0.0
        %279 = vmatpush1.msra.mxu0 0.0
        %280 = vmatprep.subr.mxu0 0.0
        %281 = vmatpush1.msra.mxu0 0.0
        %282 = vmatprep.subr.mxu0 0.0
        %283 = vmatpush1.msra.mxu0 0.0
        %284 = vmatprep.subr.mxu0 0.0
        %285 = vmatpush1.msra.mxu0 0.0
        %286 = vmatprep.subr.mxu0 0.0
        %287 = vmatpush1.msra.mxu0 0.0
        %288 = vmatprep.subr.mxu0 0.0
        %289 = vmatpush1.msra.mxu0 0.0
        %290 = vmatprep.subr.mxu0 0.0
        %291 = vmatpush1.msra.mxu0 0.0
        %292 = vmatprep.subr.mxu0 0.0
        %293 = vmatpush1.msra.mxu0 0.0
        %294 = vmatprep.subr.mxu0 0.0
        %295 = vmatpush1.msra.mxu0 0.0
        %296 = vmatprep.subr.mxu0 0.0
        %297 = vmatpush1.msra.mxu0 0.0
        %298 = vmatprep.subr.mxu0 0.0
        %299 = vmatpush1.msra.mxu0 0.0
        %300 = vmatprep.subr.mxu0 0.0
        %301 = vmatpush1.msra.mxu0 0.0
        %302 = vmatprep.subr.mxu0 0.0
        %303 = vmatpush1.msra.mxu0 0.0
        %304 = vmatprep.subr.mxu0 0.0
        %305 = vmatpush1.msra.mxu0 0.0
        %306 = vmatprep.subr.mxu0 0.0
        %307 = vmatpush1.msra.mxu0 0.0
        %308 = vmatprep.subr.mxu0 0.0
        %309 = vmatpush1.msra.mxu0 0.0
        %310 = vmatprep.mubr.f32.mxu0 0.0
        %v311 = vand.u32 %v163, 4294901760
        %312 = vmatmul.mubr.f32.gmra.mrb[0].mxu0 %v311
        %v313 = vpop.f32.mrb[0].mxu0
        %v314 = vadd.f32 %v238, %v313
        %v315 = vpop.f32.mrb[0].mxu0
        %316 = vdwg.mxu0
        %317 = vmatprep.subr.mxu0 0.0
        %v318 = vand.u32 %v155, 4294901760
        %v319 = vsub.f32 %v155, %v318
        %320 = vmatpush1.msra.mxu0 %v319
        %321 = vmatprep.subr.mxu0 0.0
        %322 = vmatpush1.msra.mxu0 0.0
        %323 = vmatprep.subr.mxu0 0.0
        %324 = vmatpush1.msra.mxu0 0.0
        %325 = vmatprep.subr.mxu0 0.0
        %326 = vmatpush1.msra.mxu0 0.0
        %327 = vmatprep.subr.mxu0 0.0
        %328 = vmatpush1.msra.mxu0 0.0
        %329 = vmatprep.subr.mxu0 0.0
        %330 = vmatpush1.msra.mxu0 0.0
        %331 = vmatprep.subr.mxu0 0.0
        %332 = vmatpush1.msra.mxu0 0.0
        %333 = vmatprep.subr.mxu0 0.0
        %334 = vmatpush1.msra.mxu0 0.0
        %335 = vmatprep.subr.mxu0 0.0
        %336 = vmatpush1.msra.mxu0 0.0
        %337 = vmatprep.subr.mxu0 0.0
        %338 = vmatpush1.msra.mxu0 0.0
        %339 = vmatprep.subr.mxu0 0.0
        %340 = vmatpush1.msra.mxu0 0.0
        %341 = vmatprep.subr.mxu0 0.0
        %342 = vmatpush1.msra.mxu0 0.0
        %343 = vmatprep.subr.mxu0 0.0
        %344 = vmatpush1.msra.mxu0 0.0
        %345 = vmatprep.subr.mxu0 0.0
        %346 = vmatpush1.msra.mxu0 0.0
        %347 = vmatprep.subr.mxu0 0.0
        %348 = vmatpush1.msra.mxu0 0.0
        %349 = vmatprep.subr.mxu0 0.0
        %350 = vmatpush1.msra.mxu0 0.0
        %351 = vmatprep.subr.mxu0 0.0
        %352 = vmatpush1.msra.mxu0 0.0
        %353 = vmatprep.subr.mxu0 0.0
        %354 = vmatpush1.msra.mxu0 0.0
        %355 = vmatprep.subr.mxu0 0.0
        %356 = vmatpush1.msra.mxu0 0.0
        %357 = vmatprep.subr.mxu0 0.0
        %358 = vmatpush1.msra.mxu0 0.0
        %359 = vmatprep.subr.mxu0 0.0
        %360 = vmatpush1.msra.mxu0 0.0
        %361 = vmatprep.subr.mxu0 0.0
        %362 = vmatpush1.msra.mxu0 0.0
        %363 = vmatprep.subr.mxu0 0.0
        %364 = vmatpush1.msra.mxu0 0.0
        %365 = vmatprep.subr.mxu0 0.0
        %366 = vmatpush1.msra.mxu0 0.0
        %367 = vmatprep.subr.mxu0 0.0
        %368 = vmatpush1.msra.mxu0 0.0
        %369 = vmatprep.subr.mxu0 0.0
        %370 = vmatpush1.msra.mxu0 0.0
        %371 = vmatprep.subr.mxu0 0.0
        %372 = vmatpush1.msra.mxu0 0.0
        %373 = vmatprep.subr.mxu0 0.0
        %374 = vmatpush1.msra.mxu0 0.0
        %375 = vmatprep.subr.mxu0 0.0
        %376 = vmatpush1.msra.mxu0 0.0
        %377 = vmatprep.subr.mxu0 0.0
        %378 = vmatpush1.msra.mxu0 0.0
        %379 = vmatprep.subr.mxu0 0.0
        %380 = vmatpush1.msra.mxu0 0.0
        %381 = vmatprep.subr.mxu0 0.0
        %382 = vmatpush1.msra.mxu0 0.0
        %383 = vmatprep.mubr.f32.mxu0 0.0
        %v384 = vand.u32 %v163, 4294901760
        %v385 = vsub.f32 %v163, %v384
        %386 = vmatmul.mubr.f32.gmra.mrb[0].mxu0 %v385
        %v387 = vpop.f32.mrb[0].mxu0
        %v388 = vadd.f32 %v314, %v387
        %v389 = vpop.f32.mrb[0].mxu0
        %390 = vdwg.mxu0
        %391 = vmatprep.subr.mxu0 0.0
        %v392 = vand.u32 %v155, 4294901760
        %393 = vmatpush1.msra.mxu0 %v392
        %394 = vmatprep.subr.mxu0 0.0
        %395 = vmatpush1.msra.mxu0 0.0
        %396 = vmatprep.subr.mxu0 0.0
        %397 = vmatpush1.msra.mxu0 0.0
        %398 = vmatprep.subr.mxu0 0.0
        %399 = vmatpush1.msra.mxu0 0.0
        %400 = vmatprep.subr.mxu0 0.0
        %401 = vmatpush1.msra.mxu0 0.0
        %402 = vmatprep.subr.mxu0 0.0
        %403 = vmatpush1.msra.mxu0 0.0
        %404 = vmatprep.subr.mxu0 0.0
        %405 = vmatpush1.msra.mxu0 0.0
        %406 = vmatprep.subr.mxu0 0.0
        %407 = vmatpush1.msra.mxu0 0.0
        %408 = vmatprep.subr.mxu0 0.0
        %409 = vmatpush1.msra.mxu0 0.0
        %410 = vmatprep.subr.mxu0 0.0
        %411 = vmatpush1.msra.mxu0 0.0
        %412 = vmatprep.subr.mxu0 0.0
        %413 = vmatpush1.msra.mxu0 0.0
        %414 = vmatprep.subr.mxu0 0.0
        %415 = vmatpush1.msra.mxu0 0.0
        %416 = vmatprep.subr.mxu0 0.0
        %417 = vmatpush1.msra.mxu0 0.0
        %418 = vmatprep.subr.mxu0 0.0
        %419 = vmatpush1.msra.mxu0 0.0
        %420 = vmatprep.subr.mxu0 0.0
        %421 = vmatpush1.msra.mxu0 0.0
        %422 = vmatprep.subr.mxu0 0.0
        %423 = vmatpush1.msra.mxu0 0.0
        %424 = vmatprep.subr.mxu0 0.0
        %425 = vmatpush1.msra.mxu0 0.0
        %426 = vmatprep.subr.mxu0 0.0
        %427 = vmatpush1.msra.mxu0 0.0
        %428 = vmatprep.subr.mxu0 0.0
        %429 = vmatpush1.msra.mxu0 0.0
        %430 = vmatprep.subr.mxu0 0.0
        %431 = vmatpush1.msra.mxu0 0.0
        %432 = vmatprep.subr.mxu0 0.0
        %433 = vmatpush1.msra.mxu0 0.0
        %434 = vmatprep.subr.mxu0 0.0
        %435 = vmatpush1.msra.mxu0 0.0
        %436 = vmatprep.subr.mxu0 0.0
        %437 = vmatpush1.msra.mxu0 0.0
        %438 = vmatprep.subr.mxu0 0.0
        %439 = vmatpush1.msra.mxu0 0.0
        %440 = vmatprep.subr.mxu0 0.0
        %441 = vmatpush1.msra.mxu0 0.0
        %442 = vmatprep.subr.mxu0 0.0
        %443 = vmatpush1.msra.mxu0 0.0
        %444 = vmatprep.subr.mxu0 0.0
        %445 = vmatpush1.msra.mxu0 0.0
        %446 = vmatprep.subr.mxu0 0.0
        %447 = vmatpush1.msra.mxu0 0.0
        %448 = vmatprep.subr.mxu0 0.0
        %449 = vmatpush1.msra.mxu0 0.0
        %450 = vmatprep.subr.mxu0 0.0
        %451 = vmatpush1.msra.mxu0 0.0
        %452 = vmatprep.subr.mxu0 0.0
        %453 = vmatpush1.msra.mxu0 0.0
        %454 = vmatprep.subr.mxu0 0.0
        %455 = vmatpush1.msra.mxu0 0.0
        %456 = vmatprep.mubr.f32.mxu0 0.0
        %v457 = vand.u32 %v163, 4294901760
        %v458 = vsub.f32 %v163, %v457
        %v459 = vand.u32 %v458, 4294901760
        %460 = vmatmul.mubr.f32.gmra.mrb[0].mxu0 %v459
        %v461 = vpop.f32.mrb[0].mxu0
        %v462 = vadd.f32 %v388, %v461
        %v463 = vpop.f32.mrb[0].mxu0
        %464 = vdwg.mxu0
        %465 = vmatprep.subr.mxu0 0.0
        %v466 = vand.u32 %v155, 4294901760
        %v467 = vsub.f32 %v155, %v466
        %v468 = vand.u32 %v467, 4294901760
        %469 = vmatpush1.msra.mxu0 %v468
        %470 = vmatprep.subr.mxu0 0.0
        %471 = vmatpush1.msra.mxu0 0.0
        %472 = vmatprep.subr.mxu0 0.0
        %473 = vmatpush1.msra.mxu0 0.0
        %474 = vmatprep.subr.mxu0 0.0
        %475 = vmatpush1.msra.mxu0 0.0
        %476 = vmatprep.subr.mxu0 0.0
        %477 = vmatpush1.msra.mxu0 0.0
        %478 = vmatprep.subr.mxu0 0.0
        %479 = vmatpush1.msra.mxu0 0.0
        %480 = vmatprep.subr.mxu0 0.0
        %481 = vmatpush1.msra.mxu0 0.0
        %482 = vmatprep.subr.mxu0 0.0
        %483 = vmatpush1.msra.mxu0 0.0
        %484 = vmatprep.subr.mxu0 0.0
        %485 = vmatpush1.msra.mxu0 0.0
        %486 = vmatprep.subr.mxu0 0.0
        %487 = vmatpush1.msra.mxu0 0.0
        %488 = vmatprep.subr.mxu0 0.0
        %489 = vmatpush1.msra.mxu0 0.0
        %490 = vmatprep.subr.mxu0 0.0
        %491 = vmatpush1.msra.mxu0 0.0
        %492 = vmatprep.subr.mxu0 0.0
        %493 = vmatpush1.msra.mxu0 0.0
        %494 = vmatprep.subr.mxu0 0.0
        %495 = vmatpush1.msra.mxu0 0.0
        %496 = vmatprep.subr.mxu0 0.0
        %497 = vmatpush1.msra.mxu0 0.0
        %498 = vmatprep.subr.mxu0 0.0
        %499 = vmatpush1.msra.mxu0 0.0
        %500 = vmatprep.subr.mxu0 0.0
        %501 = vmatpush1.msra.mxu0 0.0
        %502 = vmatprep.subr.mxu0 0.0
        %503 = vmatpush1.msra.mxu0 0.0
        %504 = vmatprep.subr.mxu0 0.0
        %505 = vmatpush1.msra.mxu0 0.0
        %506 = vmatprep.subr.mxu0 0.0
        %507 = vmatpush1.msra.mxu0 0.0
        %508 = vmatprep.subr.mxu0 0.0
        %509 = vmatpush1.msra.mxu0 0.0
        %510 = vmatprep.subr.mxu0 0.0
        %511 = vmatpush1.msra.mxu0 0.0
        %512 = vmatprep.subr.mxu0 0.0
        %513 = vmatpush1.msra.mxu0 0.0
        %514 = vmatprep.subr.mxu0 0.0
        %515 = vmatpush1.msra.mxu0 0.0
        %516 = vmatprep.subr.mxu0 0.0
        %517 = vmatpush1.msra.mxu0 0.0
        %518 = vmatprep.subr.mxu0 0.0
        %519 = vmatpush1.msra.mxu0 0.0
        %520 = vmatprep.subr.mxu0 0.0
        %521 = vmatpush1.msra.mxu0 0.0
        %522 = vmatprep.subr.mxu0 0.0
        %523 = vmatpush1.msra.mxu0 0.0
        %524 = vmatprep.subr.mxu0 0.0
        %525 = vmatpush1.msra.mxu0 0.0
        %526 = vmatprep.subr.mxu0 0.0
        %527 = vmatpush1.msra.mxu0 0.0
        %528 = vmatprep.subr.mxu0 0.0
        %529 = vmatpush1.msra.mxu0 0.0
        %530 = vmatprep.subr.mxu0 0.0
        %531 = vmatpush1.msra.mxu0 0.0
        %532 = vmatprep.mubr.f32.mxu0 0.0
        %v533 = vand.u32 %v163, 4294901760
        %534 = vmatmul.mubr.f32.gmra.mrb[0].mxu0 %v533
        %v535 = vpop.f32.mrb[0].mxu0
        %v536 = vadd.f32 %v462, %v535
        %v537 = vpop.f32.mrb[0].mxu0
        %538 = vdwg.mxu0
        %539 = vmatprep.subr.mxu0 0.0
        %v540 = vand.u32 %v155, 4294901760
        %541 = vmatpush1.msra.mxu0 %v540
        %542 = vmatprep.subr.mxu0 0.0
        %543 = vmatpush1.msra.mxu0 0.0
        %544 = vmatprep.subr.mxu0 0.0
        %545 = vmatpush1.msra.mxu0 0.0
        %546 = vmatprep.subr.mxu0 0.0
        %547 = vmatpush1.msra.mxu0 0.0
        %548 = vmatprep.subr.mxu0 0.0
        %549 = vmatpush1.msra.mxu0 0.0
        %550 = vmatprep.subr.mxu0 0.0
        %551 = vmatpush1.msra.mxu0 0.0
        %552 = vmatprep.subr.mxu0 0.0
        %553 = vmatpush1.msra.mxu0 0.0
        %554 = vmatprep.subr.mxu0 0.0
        %555 = vmatpush1.msra.mxu0 0.0
        %556 = vmatprep.subr.mxu0 0.0
        %557 = vmatpush1.msra.mxu0 0.0
        %558 = vmatprep.subr.mxu0 0.0
        %559 = vmatpush1.msra.mxu0 0.0
        %560 = vmatprep.subr.mxu0 0.0
        %561 = vmatpush1.msra.mxu0 0.0
        %562 = vmatprep.subr.mxu0 0.0
        %563 = vmatpush1.msra.mxu0 0.0
        %564 = vmatprep.subr.mxu0 0.0
        %565 = vmatpush1.msra.mxu0 0.0
        %566 = vmatprep.subr.mxu0 0.0
        %567 = vmatpush1.msra.mxu0 0.0
        %568 = vmatprep.subr.mxu0 0.0
        %569 = vmatpush1.msra.mxu0 0.0
        %570 = vmatprep.subr.mxu0 0.0
        %571 = vmatpush1.msra.mxu0 0.0
        %572 = vmatprep.subr.mxu0 0.0
        %573 = vmatpush1.msra.mxu0 0.0
        %574 = vmatprep.subr.mxu0 0.0
        %575 = vmatpush1.msra.mxu0 0.0
        %576 = vmatprep.subr.mxu0 0.0
        %577 = vmatpush1.msra.mxu0 0.0
        %578 = vmatprep.subr.mxu0 0.0
        %579 = vmatpush1.msra.mxu0 0.0
        %580 = vmatprep.subr.mxu0 0.0
        %581 = vmatpush1.msra.mxu0 0.0
        %582 = vmatprep.subr.mxu0 0.0
        %583 = vmatpush1.msra.mxu0 0.0
        %584 = vmatprep.subr.mxu0 0.0
        %585 = vmatpush1.msra.mxu0 0.0
        %586 = vmatprep.subr.mxu0 0.0
        %587 = vmatpush1.msra.mxu0 0.0
        %588 = vmatprep.subr.mxu0 0.0
        %589 = vmatpush1.msra.mxu0 0.0
        %590 = vmatprep.subr.mxu0 0.0
        %591 = vmatpush1.msra.mxu0 0.0
        %592 = vmatprep.subr.mxu0 0.0
        %593 = vmatpush1.msra.mxu0 0.0
        %594 = vmatprep.subr.mxu0 0.0
        %595 = vmatpush1.msra.mxu0 0.0
        %596 = vmatprep.subr.mxu0 0.0
        %597 = vmatpush1.msra.mxu0 0.0
        %598 = vmatprep.subr.mxu0 0.0
        %599 = vmatpush1.msra.mxu0 0.0
        %600 = vmatprep.subr.mxu0 0.0
        %601 = vmatpush1.msra.mxu0 0.0
        %602 = vmatprep.subr.mxu0 0.0
        %603 = vmatpush1.msra.mxu0 0.0
        %604 = vmatprep.mubr.f32.mxu0 0.0
        %v605 = vand.u32 %v163, 4294901760
        %606 = vmatmul.mubr.f32.gmra.mrb[0].mxu0 %v605
        %v607 = vpop.f32.mrb[0].mxu0
        %v608 = vadd.f32 %v536, %v607
        %v609 = vpop.f32.mrb[0].mxu0
        %610 = vdwg.mxu0
        %v611 = vmax.f32 %v608, 0.0
        %v612 = vld [vmem:[#allocation2 + $0x10] sm:$0xff]
        %v613 = vld [vmem:[#allocation2 + $0x18] sm:$0xff]
        %v614 = vld [vmem:[#allocation2 + $0x20] sm:$0xff]
        %v615 = vld [vmem:[#allocation2 + $0x28] sm:$0xff]
        %v616 = vld [vmem:[#allocation2 + $0x30] sm:$0xff]
        %v617 = vld [vmem:[#allocation2 + $0x38] sm:$0xff]
        %v618 = vld [vmem:[#allocation2 + $0x40] sm:$0xff]
        %v619 = vld [vmem:[#allocation2 + $0x48] sm:$0xff]
        %v620 = vld [vmem:[#allocation2 + $0x50] sm:$0x1]
        %v621 = vlaneseq
        %v622 = vshrl.u32 %v621, 7
        %v623 = vsub.s32 0, %v622
        %v624 = vrot.slane %v620, %v623
        %vm625 = vcmask 523264
        %v627 = vsel %vm625, %v611, 0
        %629 = vmatprep.subr.mxu0 0.0
        %v630 = vand.u32 %v612, 4294901760
        %631 = vmatpush1.msra.mxu0 %v630
        %632 = vmatprep.subr.mxu0 0.0
        %v633 = vand.u32 %v613, 4294901760
        %634 = vmatpush1.msra.mxu0 %v633
        %635 = vmatprep.subr.mxu0 0.0
        %v636 = vand.u32 %v614, 4294901760
        %637 = vmatpush1.msra.mxu0 %v636
        %638 = vmatprep.subr.mxu0 0.0
        %v639 = vand.u32 %v615, 4294901760
        %640 = vmatpush1.msra.mxu0 %v639
        %641 = vmatprep.subr.mxu0 0.0
        %v642 = vand.u32 %v616, 4294901760
        %643 = vmatpush1.msra.mxu0 %v642
        %644 = vmatprep.subr.mxu0 0.0
        %v645 = vand.u32 %v617, 4294901760
        %646 = vmatpush1.msra.mxu0 %v645
        %647 = vmatprep.subr.mxu0 0.0
        %v648 = vand.u32 %v618, 4294901760
        %649 = vmatpush1.msra.mxu0 %v648
        %650 = vmatprep.subr.mxu0 0.0
        %v651 = vand.u32 %v619, 4294901760
        %652 = vmatpush1.msra.mxu0 %v651
        %653 = vmatprep.subr.mxu0 0.0
        %654 = vmatpush1.msra.mxu0 0.0
        %655 = vmatprep.subr.mxu0 0.0
        %656 = vmatpush1.msra.mxu0 0.0
        %657 = vmatprep.subr.mxu0 0.0
        %658 = vmatpush1.msra.mxu0 0.0
        %659 = vmatprep.subr.mxu0 0.0
        %660 = vmatpush1.msra.mxu0 0.0
        %661 = vmatprep.subr.mxu0 0.0
        %662 = vmatpush1.msra.mxu0 0.0
        %663 = vmatprep.subr.mxu0 0.0
        %664 = vmatpush1.msra.mxu0 0.0
        %665 = vmatprep.subr.mxu0 0.0
        %666 = vmatpush1.msra.mxu0 0.0
        %667 = vmatprep.subr.mxu0 0.0
        %668 = vmatpush1.msra.mxu0 0.0
        %669 = vmatprep.subr.mxu0 0.0
        %670 = vmatpush1.msra.mxu0 0.0
        %671 = vmatprep.subr.mxu0 0.0
        %672 = vmatpush1.msra.mxu0 0.0
        %673 = vmatprep.subr.mxu0 0.0
        %674 = vmatpush1.msra.mxu0 0.0
        %675 = vmatprep.subr.mxu0 0.0
        %676 = vmatpush1.msra.mxu0 0.0
        %677 = vmatprep.subr.mxu0 0.0
        %678 = vmatpush1.msra.mxu0 0.0
        %679 = vmatprep.subr.mxu0 0.0
        %680 = vmatpush1.msra.mxu0 0.0
        %681 = vmatprep.subr.mxu0 0.0
        %682 = vmatpush1.msra.mxu0 0.0
        %683 = vmatprep.subr.mxu0 0.0
        %684 = vmatpush1.msra.mxu0 0.0
        %685 = vmatprep.subr.mxu0 0.0
        %686 = vmatpush1.msra.mxu0 0.0
        %687 = vmatprep.subr.mxu0 0.0
        %688 = vmatpush1.msra.mxu0 0.0
        %689 = vmatprep.subr.mxu0 0.0
        %690 = vmatpush1.msra.mxu0 0.0
        %691 = vmatprep.subr.mxu0 0.0
        %692 = vmatpush1.msra.mxu0 0.0
        %693 = vmatprep.subr.mxu0 0.0
        %694 = vmatpush1.msra.mxu0 0.0
        %695 = vmatprep.subr.mxu0 0.0
        %696 = vmatpush1.msra.mxu0 0.0
        %697 = vmatprep.subr.mxu0 0.0
        %698 = vmatpush1.msra.mxu0 0.0
        %699 = vmatprep.subr.mxu0 0.0
        %700 = vmatpush1.msra.mxu0 0.0
        %701 = vmatprep.mubr.f32.mxu0 0.0
        %v702 = vand.u32 %v627, 4294901760
        %v703 = vsub.f32 %v627, %v702
        %v704 = vand.u32 %v703, 4294901760
        %v705 = vsub.f32 %v703, %v704
        %v706 = vand.u32 %v705, 4294901760
        %707 = vmatmul.mubr.f32.gmra.mrb[0].mxu0 %v706
        %v708 = vpop.f32.mrb[0].mxu0
        %v709 = vadd.f32 %v624, %v708
        %v710 = vpop.f32.mrb[0].mxu0
        %711 = vdwg.mxu0
        %712 = vmatprep.subr.mxu0 0.0
        %v713 = vand.u32 %v612, 4294901760
        %v714 = vsub.f32 %v612, %v713
        %v715 = vand.u32 %v714, 4294901760
        %v716 = vsub.f32 %v714, %v715
        %v717 = vand.u32 %v716, 4294901760
        %718 = vmatpush1.msra.mxu0 %v717
        %719 = vmatprep.subr.mxu0 0.0
        %v720 = vand.u32 %v613, 4294901760
        %v721 = vsub.f32 %v613, %v720
        %v722 = vand.u32 %v721, 4294901760
        %v723 = vsub.f32 %v721, %v722
        %v724 = vand.u32 %v723, 4294901760
        %725 = vmatpush1.msra.mxu0 %v724
        %726 = vmatprep.subr.mxu0 0.0
        %v727 = vand.u32 %v614, 4294901760
        %v728 = vsub.f32 %v614, %v727
        %v729 = vand.u32 %v728, 4294901760
        %v730 = vsub.f32 %v728, %v729
        %v731 = vand.u32 %v730, 4294901760
        %732 = vmatpush1.msra.mxu0 %v731
        %733 = vmatprep.subr.mxu0 0.0
        %v734 = vand.u32 %v615, 4294901760
        %v735 = vsub.f32 %v615, %v734
        %v736 = vand.u32 %v735, 4294901760
        %v737 = vsub.f32 %v735, %v736
        %v738 = vand.u32 %v737, 4294901760
        %739 = vmatpush1.msra.mxu0 %v738
        %740 = vmatprep.subr.mxu0 0.0
        %v741 = vand.u32 %v616, 4294901760
        %v742 = vsub.f32 %v616, %v741
        %v743 = vand.u32 %v742, 4294901760
        %v744 = vsub.f32 %v742, %v743
        %v745 = vand.u32 %v744, 4294901760
        %746 = vmatpush1.msra.mxu0 %v745
        %747 = vmatprep.subr.mxu0 0.0
        %v748 = vand.u32 %v617, 4294901760
        %v749 = vsub.f32 %v617, %v748
        %v750 = vand.u32 %v749, 4294901760
        %v751 = vsub.f32 %v749, %v750
        %v752 = vand.u32 %v751, 4294901760
        %753 = vmatpush1.msra.mxu0 %v752
        %754 = vmatprep.subr.mxu0 0.0
        %v755 = vand.u32 %v618, 4294901760
        %v756 = vsub.f32 %v618, %v755
        %v757 = vand.u32 %v756, 4294901760
        %v758 = vsub.f32 %v756, %v757
        %v759 = vand.u32 %v758, 4294901760
        %760 = vmatpush1.msra.mxu0 %v759
        %761 = vmatprep.subr.mxu0 0.0
        %v762 = vand.u32 %v619, 4294901760
        %v763 = vsub.f32 %v619, %v762
        %v764 = vand.u32 %v763, 4294901760
        %v765 = vsub.f32 %v763, %v764
        %v766 = vand.u32 %v765, 4294901760
        %767 = vmatpush1.msra.mxu0 %v766
        %768 = vmatprep.subr.mxu0 0.0
        %769 = vmatpush1.msra.mxu0 0.0
        %770 = vmatprep.subr.mxu0 0.0
        %771 = vmatpush1.msra.mxu0 0.0
        %772 = vmatprep.subr.mxu0 0.0
        %773 = vmatpush1.msra.mxu0 0.0
        %774 = vmatprep.subr.mxu0 0.0
        %775 = vmatpush1.msra.mxu0 0.0
        %776 = vmatprep.subr.mxu0 0.0
        %777 = vmatpush1.msra.mxu0 0.0
        %778 = vmatprep.subr.mxu0 0.0
        %779 = vmatpush1.msra.mxu0 0.0
        %780 = vmatprep.subr.mxu0 0.0
        %781 = vmatpush1.msra.mxu0 0.0
        %782 = vmatprep.subr.mxu0 0.0
        %783 = vmatpush1.msra.mxu0 0.0
        %784 = vmatprep.subr.mxu0 0.0
        %785 = vmatpush1.msra.mxu0 0.0
        %786 = vmatprep.subr.mxu0 0.0
        %787 = vmatpush1.msra.mxu0 0.0
        %788 = vmatprep.subr.mxu0 0.0
        %789 = vmatpush1.msra.mxu0 0.0
        %790 = vmatprep.subr.mxu0 0.0
        %791 = vmatpush1.msra.mxu0 0.0
        %792 = vmatprep.subr.mxu0 0.0
        %793 = vmatpush1.msra.mxu0 0.0
        %794 = vmatprep.subr.mxu0 0.0
        %795 = vmatpush1.msra.mxu0 0.0
        %796 = vmatprep.subr.mxu0 0.0
        %797 = vmatpush1.msra.mxu0 0.0
        %798 = vmatprep.subr.mxu0 0.0
        %799 = vmatpush1.msra.mxu0 0.0
        %800 = vmatprep.subr.mxu0 0.0
        %801 = vmatpush1.msra.mxu0 0.0
        %802 = vmatprep.subr.mxu0 0.0
        %803 = vmatpush1.msra.mxu0 0.0
        %804 = vmatprep.subr.mxu0 0.0
        %805 = vmatpush1.msra.mxu0 0.0
        %806 = vmatprep.subr.mxu0 0.0
        %807 = vmatpush1.msra.mxu0 0.0
        %808 = vmatprep.subr.mxu0 0.0
        %809 = vmatpush1.msra.mxu0 0.0
        %810 = vmatprep.subr.mxu0 0.0
        %811 = vmatpush1.msra.mxu0 0.0
        %812 = vmatprep.subr.mxu0 0.0
        %813 = vmatpush1.msra.mxu0 0.0
        %814 = vmatprep.subr.mxu0 0.0
        %815 = vmatpush1.msra.mxu0 0.0
        %816 = vmatprep.mubr.f32.mxu0 0.0
        %v817 = vand.u32 %v627, 4294901760
        %818 = vmatmul.mubr.f32.gmra.mrb[0].mxu0 %v817
        %v819 = vpop.f32.mrb[0].mxu0
        %v820 = vadd.f32 %v709, %v819
        %v821 = vpop.f32.mrb[0].mxu0
        %822 = vdwg.mxu0
        %823 = vmatprep.subr.mxu0 0.0
        %v824 = vand.u32 %v612, 4294901760
        %v825 = vsub.f32 %v612, %v824
        %826 = vmatpush1.msra.mxu0 %v825
        %827 = vmatprep.subr.mxu0 0.0
        %v828 = vand.u32 %v613, 4294901760
        %v829 = vsub.f32 %v613, %v828
        %830 = vmatpush1.msra.mxu0 %v829
        %831 = vmatprep.subr.mxu0 0.0
        %v832 = vand.u32 %v614, 4294901760
        %v833 = vsub.f32 %v614, %v832
        %834 = vmatpush1.msra.mxu0 %v833
        %835 = vmatprep.subr.mxu0 0.0
        %v836 = vand.u32 %v615, 4294901760
        %v837 = vsub.f32 %v615, %v836
        %838 = vmatpush1.msra.mxu0 %v837
        %839 = vmatprep.subr.mxu0 0.0
        %v840 = vand.u32 %v616, 4294901760
        %v841 = vsub.f32 %v616, %v840
        %842 = vmatpush1.msra.mxu0 %v841
        %843 = vmatprep.subr.mxu0 0.0
        %v844 = vand.u32 %v617, 4294901760
        %v845 = vsub.f32 %v617, %v844
        %846 = vmatpush1.msra.mxu0 %v845
        %847 = vmatprep.subr.mxu0 0.0
        %v848 = vand.u32 %v618, 4294901760
        %v849 = vsub.f32 %v618, %v848
        %850 = vmatpush1.msra.mxu0 %v849
        %851 = vmatprep.subr.mxu0 0.0
        %v852 = vand.u32 %v619, 4294901760
        %v853 = vsub.f32 %v619, %v852
        %854 = vmatpush1.msra.mxu0 %v853
        %855 = vmatprep.subr.mxu0 0.0
        %856 = vmatpush1.msra.mxu0 0.0
        %857 = vmatprep.subr.mxu0 0.0
        %858 = vmatpush1.msra.mxu0 0.0
        %859 = vmatprep.subr.mxu0 0.0
        %860 = vmatpush1.msra.mxu0 0.0
        %861 = vmatprep.subr.mxu0 0.0
        %862 = vmatpush1.msra.mxu0 0.0
        %863 = vmatprep.subr.mxu0 0.0
        %864 = vmatpush1.msra.mxu0 0.0
        %865 = vmatprep.subr.mxu0 0.0
        %866 = vmatpush1.msra.mxu0 0.0
        %867 = vmatprep.subr.mxu0 0.0
        %868 = vmatpush1.msra.mxu0 0.0
        %869 = vmatprep.subr.mxu0 0.0
        %870 = vmatpush1.msra.mxu0 0.0
        %871 = vmatprep.subr.mxu0 0.0
        %872 = vmatpush1.msra.mxu0 0.0
        %873 = vmatprep.subr.mxu0 0.0
        %874 = vmatpush1.msra.mxu0 0.0
        %875 = vmatprep.subr.mxu0 0.0
        %876 = vmatpush1.msra.mxu0 0.0
        %877 = vmatprep.subr.mxu0 0.0
        %878 = vmatpush1.msra.mxu0 0.0
        %879 = vmatprep.subr.mxu0 0.0
        %880 = vmatpush1.msra.mxu0 0.0
        %881 = vmatprep.subr.mxu0 0.0
        %882 = vmatpush1.msra.mxu0 0.0
        %883 = vmatprep.subr.mxu0 0.0
        %884 = vmatpush1.msra.mxu0 0.0
        %885 = vmatprep.subr.mxu0 0.0
        %886 = vmatpush1.msra.mxu0 0.0
        %887 = vmatprep.subr.mxu0 0.0
        %888 = vmatpush1.msra.mxu0 0.0
        %889 = vmatprep.subr.mxu0 0.0
        %890 = vmatpush1.msra.mxu0 0.0
        %891 = vmatprep.subr.mxu0 0.0
        %892 = vmatpush1.msra.mxu0 0.0
        %893 = vmatprep.subr.mxu0 0.0
        %894 = vmatpush1.msra.mxu0 0.0
        %895 = vmatprep.subr.mxu0 0.0
        %896 = vmatpush1.msra.mxu0 0.0
        %897 = vmatprep.subr.mxu0 0.0
        %898 = vmatpush1.msra.mxu0 0.0
        %899 = vmatprep.subr.mxu0 0.0
        %900 = vmatpush1.msra.mxu0 0.0
        %901 = vmatprep.subr.mxu0 0.0
        %902 = vmatpush1.msra.mxu0 0.0
        %903 = vmatprep.mubr.f32.mxu0 0.0
        %v904 = vand.u32 %v627, 4294901760
        %v905 = vsub.f32 %v627, %v904
        %906 = vmatmul.mubr.f32.gmra.mrb[0].mxu0 %v905
        %v907 = vpop.f32.mrb[0].mxu0
        %v908 = vadd.f32 %v820, %v907
        %v909 = vpop.f32.mrb[0].mxu0
        %910 = vdwg.mxu0
        %911 = vmatprep.subr.mxu0 0.0
        %v912 = vand.u32 %v612, 4294901760
        %913 = vmatpush1.msra.mxu0 %v912
        %914 = vmatprep.subr.mxu0 0.0
        %v915 = vand.u32 %v613, 4294901760
        %916 = vmatpush1.msra.mxu0 %v915
        %917 = vmatprep.subr.mxu0 0.0
        %v918 = vand.u32 %v614, 4294901760
        %919 = vmatpush1.msra.mxu0 %v918
        %920 = vmatprep.subr.mxu0 0.0
        %v921 = vand.u32 %v615, 4294901760
        %922 = vmatpush1.msra.mxu0 %v921
        %923 = vmatprep.subr.mxu0 0.0
        %v924 = vand.u32 %v616, 4294901760
        %925 = vmatpush1.msra.mxu0 %v924
        %926 = vmatprep.subr.mxu0 0.0
        %v927 = vand.u32 %v617, 4294901760
        %928 = vmatpush1.msra.mxu0 %v927
        %929 = vmatprep.subr.mxu0 0.0
        %v930 = vand.u32 %v618, 4294901760
        %931 = vmatpush1.msra.mxu0 %v930
        %932 = vmatprep.subr.mxu0 0.0
        %v933 = vand.u32 %v619, 4294901760
        %934 = vmatpush1.msra.mxu0 %v933
        %935 = vmatprep.subr.mxu0 0.0
        %936 = vmatpush1.msra.mxu0 0.0
        %937 = vmatprep.subr.mxu0 0.0
        %938 = vmatpush1.msra.mxu0 0.0
        %939 = vmatprep.subr.mxu0 0.0
        %940 = vmatpush1.msra.mxu0 0.0
        %941 = vmatprep.subr.mxu0 0.0
        %942 = vmatpush1.msra.mxu0 0.0
        %943 = vmatprep.subr.mxu0 0.0
        %944 = vmatpush1.msra.mxu0 0.0
        %945 = vmatprep.subr.mxu0 0.0
        %946 = vmatpush1.msra.mxu0 0.0
        %947 = vmatprep.subr.mxu0 0.0
        %948 = vmatpush1.msra.mxu0 0.0
        %949 = vmatprep.subr.mxu0 0.0
        %950 = vmatpush1.msra.mxu0 0.0
        %951 = vmatprep.subr.mxu0 0.0
        %952 = vmatpush1.msra.mxu0 0.0
        %953 = vmatprep.subr.mxu0 0.0
        %954 = vmatpush1.msra.mxu0 0.0
        %955 = vmatprep.subr.mxu0 0.0
        %956 = vmatpush1.msra.mxu0 0.0
        %957 = vmatprep.subr.mxu0 0.0
        %958 = vmatpush1.msra.mxu0 0.0
        %959 = vmatprep.subr.mxu0 0.0
        %960 = vmatpush1.msra.mxu0 0.0
        %961 = vmatprep.subr.mxu0 0.0
        %962 = vmatpush1.msra.mxu0 0.0
        %963 = vmatprep.subr.mxu0 0.0
        %964 = vmatpush1.msra.mxu0 0.0
        %965 = vmatprep.subr.mxu0 0.0
        %966 = vmatpush1.msra.mxu0 0.0
        %967 = vmatprep.subr.mxu0 0.0
        %968 = vmatpush1.msra.mxu0 0.0
        %969 = vmatprep.subr.mxu0 0.0
        %970 = vmatpush1.msra.mxu0 0.0
        %971 = vmatprep.subr.mxu0 0.0
        %972 = vmatpush1.msra.mxu0 0.0
        %973 = vmatprep.subr.mxu0 0.0
        %974 = vmatpush1.msra.mxu0 0.0
        %975 = vmatprep.subr.mxu0 0.0
        %976 = vmatpush1.msra.mxu0 0.0
        %977 = vmatprep.subr.mxu0 0.0
        %978 = vmatpush1.msra.mxu0 0.0
        %979 = vmatprep.subr.mxu0 0.0
        %980 = vmatpush1.msra.mxu0 0.0
        %981 = vmatprep.subr.mxu0 0.0
        %982 = vmatpush1.msra.mxu0 0.0
        %983 = vmatprep.mubr.f32.mxu0 0.0
        %v984 = vand.u32 %v627, 4294901760
        %v985 = vsub.f32 %v627, %v984
        %v986 = vand.u32 %v985, 4294901760
        %987 = vmatmul.mubr.f32.gmra.mrb[0].mxu0 %v986
        %v988 = vpop.f32.mrb[0].mxu0
        %v989 = vadd.f32 %v908, %v988
        %v990 = vpop.f32.mrb[0].mxu0
        %991 = vdwg.mxu0
        %992 = vmatprep.subr.mxu0 0.0
        %v993 = vand.u32 %v612, 4294901760
        %v994 = vsub.f32 %v612, %v993
        %v995 = vand.u32 %v994, 4294901760
        %996 = vmatpush1.msra.mxu0 %v995
        %997 = vmatprep.subr.mxu0 0.0
        %v998 = vand.u32 %v613, 4294901760
        %v999 = vsub.f32 %v613, %v998
        %v1000 = vand.u32 %v999, 4294901760
        %1001 = vmatpush1.msra.mxu0 %v1000
        %1002 = vmatprep.subr.mxu0 0.0
        %v1003 = vand.u32 %v614, 4294901760
        %v1004 = vsub.f32 %v614, %v1003
        %v1005 = vand.u32 %v1004, 4294901760
        %1006 = vmatpush1.msra.mxu0 %v1005
        %1007 = vmatprep.subr.mxu0 0.0
        %v1008 = vand.u32 %v615, 4294901760
        %v1009 = vsub.f32 %v615, %v1008
        %v1010 = vand.u32 %v1009, 4294901760
        %1011 = vmatpush1.msra.mxu0 %v1010
        %1012 = vmatprep.subr.mxu0 0.0
        %v1013 = vand.u32 %v616, 4294901760
        %v1014 = vsub.f32 %v616, %v1013
        %v1015 = vand.u32 %v1014, 4294901760
        %1016 = vmatpush1.msra.mxu0 %v1015
        %1017 = vmatprep.subr.mxu0 0.0
        %v1018 = vand.u32 %v617, 4294901760
        %v1019 = vsub.f32 %v617, %v1018
        %v1020 = vand.u32 %v1019, 4294901760
        %1021 = vmatpush1.msra.mxu0 %v1020
        %1022 = vmatprep.subr.mxu0 0.0
        %v1023 = vand.u32 %v618, 4294901760
        %v1024 = vsub.f32 %v618, %v1023
        %v1025 = vand.u32 %v1024, 4294901760
        %1026 = vmatpush1.msra.mxu0 %v1025
        %1027 = vmatprep.subr.mxu0 0.0
        %v1028 = vand.u32 %v619, 4294901760
        %v1029 = vsub.f32 %v619, %v1028
        %v1030 = vand.u32 %v1029, 4294901760
        %1031 = vmatpush1.msra.mxu0 %v1030
        %1032 = vmatprep.subr.mxu0 0.0
        %1033 = vmatpush1.msra.mxu0 0.0
        %1034 = vmatprep.subr.mxu0 0.0
        %1035 = vmatpush1.msra.mxu0 0.0
        %1036 = vmatprep.subr.mxu0 0.0
        %1037 = vmatpush1.msra.mxu0 0.0
        %1038 = vmatprep.subr.mxu0 0.0
        %1039 = vmatpush1.msra.mxu0 0.0
        %1040 = vmatprep.subr.mxu0 0.0
        %1041 = vmatpush1.msra.mxu0 0.0
        %1042 = vmatprep.subr.mxu0 0.0
        %1043 = vmatpush1.msra.mxu0 0.0
        %1044 = vmatprep.subr.mxu0 0.0
        %1045 = vmatpush1.msra.mxu0 0.0
        %1046 = vmatprep.subr.mxu0 0.0
        %1047 = vmatpush1.msra.mxu0 0.0
        %1048 = vmatprep.subr.mxu0 0.0
        %1049 = vmatpush1.msra.mxu0 0.0
        %1050 = vmatprep.subr.mxu0 0.0
        %1051 = vmatpush1.msra.mxu0 0.0
        %1052 = vmatprep.subr.mxu0 0.0
        %1053 = vmatpush1.msra.mxu0 0.0
        %1054 = vmatprep.subr.mxu0 0.0
        %1055 = vmatpush1.msra.mxu0 0.0
        %1056 = vmatprep.subr.mxu0 0.0
        %1057 = vmatpush1.msra.mxu0 0.0
        %1058 = vmatprep.subr.mxu0 0.0
        %1059 = vmatpush1.msra.mxu0 0.0
        %1060 = vmatprep.subr.mxu0 0.0
        %1061 = vmatpush1.msra.mxu0 0.0
        %1062 = vmatprep.subr.mxu0 0.0
        %1063 = vmatpush1.msra.mxu0 0.0
        %1064 = vmatprep.subr.mxu0 0.0
        %1065 = vmatpush1.msra.mxu0 0.0
        %1066 = vmatprep.subr.mxu0 0.0
        %1067 = vmatpush1.msra.mxu0 0.0
        %1068 = vmatprep.subr.mxu0 0.0
        %1069 = vmatpush1.msra.mxu0 0.0
        %1070 = vmatprep.subr.mxu0 0.0
        %1071 = vmatpush1.msra.mxu0 0.0
        %1072 = vmatprep.subr.mxu0 0.0
        %1073 = vmatpush1.msra.mxu0 0.0
        %1074 = vmatprep.subr.mxu0 0.0
        %1075 = vmatpush1.msra.mxu0 0.0
        %1076 = vmatprep.subr.mxu0 0.0
        %1077 = vmatpush1.msra.mxu0 0.0
        %1078 = vmatprep.subr.mxu0 0.0
        %1079 = vmatpush1.msra.mxu0 0.0
        %1080 = vmatprep.mubr.f32.mxu0 0.0
        %v1081 = vand.u32 %v627, 4294901760
        %1082 = vmatmul.mubr.f32.gmra.mrb[0].mxu0 %v1081
        %v1083 = vpop.f32.mrb[0].mxu0
        %v1084 = vadd.f32 %v989, %v1083
        %v1085 = vpop.f32.mrb[0].mxu0
        %1086 = vdwg.mxu0
        %1087 = vmatprep.subr.mxu0 0.0
        %v1088 = vand.u32 %v612, 4294901760
        %1089 = vmatpush1.msra.mxu0 %v1088
        %1090 = vmatprep.subr.mxu0 0.0
        %v1091 = vand.u32 %v613, 4294901760
        %1092 = vmatpush1.msra.mxu0 %v1091
        %1093 = vmatprep.subr.mxu0 0.0
        %v1094 = vand.u32 %v614, 4294901760
        %1095 = vmatpush1.msra.mxu0 %v1094
        %1096 = vmatprep.subr.mxu0 0.0
        %v1097 = vand.u32 %v615, 4294901760
        %1098 = vmatpush1.msra.mxu0 %v1097
        %1099 = vmatprep.subr.mxu0 0.0
        %v1100 = vand.u32 %v616, 4294901760
        %1101 = vmatpush1.msra.mxu0 %v1100
        %1102 = vmatprep.subr.mxu0 0.0
        %v1103 = vand.u32 %v617, 4294901760
        %1104 = vmatpush1.msra.mxu0 %v1103
        %1105 = vmatprep.subr.mxu0 0.0
        %v1106 = vand.u32 %v618, 4294901760
        %1107 = vmatpush1.msra.mxu0 %v1106
        %1108 = vmatprep.subr.mxu0 0.0
        %v1109 = vand.u32 %v619, 4294901760
        %1110 = vmatpush1.msra.mxu0 %v1109
        %1111 = vmatprep.subr.mxu0 0.0
        %1112 = vmatpush1.msra.mxu0 0.0
        %1113 = vmatprep.subr.mxu0 0.0
        %1114 = vmatpush1.msra.mxu0 0.0
        %1115 = vmatprep.subr.mxu0 0.0
        %1116 = vmatpush1.msra.mxu0 0.0
        %1117 = vmatprep.subr.mxu0 0.0
        %1118 = vmatpush1.msra.mxu0 0.0
        %1119 = vmatprep.subr.mxu0 0.0
        %1120 = vmatpush1.msra.mxu0 0.0
        %1121 = vmatprep.subr.mxu0 0.0
        %1122 = vmatpush1.msra.mxu0 0.0
        %1123 = vmatprep.subr.mxu0 0.0
        %1124 = vmatpush1.msra.mxu0 0.0
        %1125 = vmatprep.subr.mxu0 0.0
        %1126 = vmatpush1.msra.mxu0 0.0
        %1127 = vmatprep.subr.mxu0 0.0
        %1128 = vmatpush1.msra.mxu0 0.0
        %1129 = vmatprep.subr.mxu0 0.0
        %1130 = vmatpush1.msra.mxu0 0.0
        %1131 = vmatprep.subr.mxu0 0.0
        %1132 = vmatpush1.msra.mxu0 0.0
        %1133 = vmatprep.subr.mxu0 0.0
        %1134 = vmatpush1.msra.mxu0 0.0
        %1135 = vmatprep.subr.mxu0 0.0
        %1136 = vmatpush1.msra.mxu0 0.0
        %1137 = vmatprep.subr.mxu0 0.0
        %1138 = vmatpush1.msra.mxu0 0.0
        %1139 = vmatprep.subr.mxu0 0.0
        %1140 = vmatpush1.msra.mxu0 0.0
        %1141 = vmatprep.subr.mxu0 0.0
        %1142 = vmatpush1.msra.mxu0 0.0
        %1143 = vmatprep.subr.mxu0 0.0
        %1144 = vmatpush1.msra.mxu0 0.0
        %1145 = vmatprep.subr.mxu0 0.0
        %1146 = vmatpush1.msra.mxu0 0.0
        %1147 = vmatprep.subr.mxu0 0.0
        %1148 = vmatpush1.msra.mxu0 0.0
        %1149 = vmatprep.subr.mxu0 0.0
        %1150 = vmatpush1.msra.mxu0 0.0
        %1151 = vmatprep.subr.mxu0 0.0
        %1152 = vmatpush1.msra.mxu0 0.0
        %1153 = vmatprep.subr.mxu0 0.0
        %1154 = vmatpush1.msra.mxu0 0.0
        %1155 = vmatprep.subr.mxu0 0.0
        %1156 = vmatpush1.msra.mxu0 0.0
        %1157 = vmatprep.subr.mxu0 0.0
        %1158 = vmatpush1.msra.mxu0 0.0
        %1159 = vmatprep.mubr.f32.mxu0 0.0
        %v1160 = vand.u32 %v627, 4294901760
        %1161 = vmatmul.mubr.f32.gmra.mrb[0].mxu0 %v1160
        %v1162 = vpop.f32.mrb[0].mxu0
        %v1163 = vadd.f32 %v1084, %v1162
        %v1164 = vpop.f32.mrb[0].mxu0
        %1165 = vdwg.mxu0
        %v1166 = vmax.f32 %v1163, 0.0
        %v1167 = vld [vmem:[#allocation2 + $0x58] sm:$0xff]
        %v1168 = vld [vmem:[#allocation2 + $0x60] sm:$0xff]
        %v1169 = vld [vmem:[#allocation2 + $0x68] sm:$0xff]
        %v1170 = vld [vmem:[#allocation2 + $0x70] sm:$0xff]
        %v1171 = vld [vmem:[#allocation2 + $0x78] sm:$0x1]
        %v1172 = vlaneseq
        %v1173 = vshrl.u32 %v1172, 7
        %v1174 = vsub.s32 0, %v1173
        %v1175 = vrot.slane %v1171, %v1174
        %vm1176 = vcmask 261120
        %v1178 = vsel %vm1176, %v1166, 0
        %1180 = vmatprep.subr.mxu0 0.0
        %v1181 = vand.u32 %v1167, 4294901760
        %1182 = vmatpush1.msra.mxu0 %v1181
        %1183 = vmatprep.subr.mxu0 0.0
        %v1184 = vand.u32 %v1168, 4294901760
        %1185 = vmatpush1.msra.mxu0 %v1184
        %1186 = vmatprep.subr.mxu0 0.0
        %v1187 = vand.u32 %v1169, 4294901760
        %1188 = vmatpush1.msra.mxu0 %v1187
        %1189 = vmatprep.subr.mxu0 0.0
        %v1190 = vand.u32 %v1170, 4294901760
        %1191 = vmatpush1.msra.mxu0 %v1190
        %1192 = vmatprep.subr.mxu0 0.0
        %1193 = vmatpush1.msra.mxu0 0.0
        %1194 = vmatprep.subr.mxu0 0.0
        %1195 = vmatpush1.msra.mxu0 0.0
        %1196 = vmatprep.subr.mxu0 0.0
        %1197 = vmatpush1.msra.mxu0 0.0
        %1198 = vmatprep.subr.mxu0 0.0
        %1199 = vmatpush1.msra.mxu0 0.0
        %1200 = vmatprep.subr.mxu0 0.0
        %1201 = vmatpush1.msra.mxu0 0.0
        %1202 = vmatprep.subr.mxu0 0.0
        %1203 = vmatpush1.msra.mxu0 0.0
        %1204 = vmatprep.subr.mxu0 0.0
        %1205 = vmatpush1.msra.mxu0 0.0
        %1206 = vmatprep.subr.mxu0 0.0
        %1207 = vmatpush1.msra.mxu0 0.0
        %1208 = vmatprep.subr.mxu0 0.0
        %1209 = vmatpush1.msra.mxu0 0.0
        %1210 = vmatprep.subr.mxu0 0.0
        %1211 = vmatpush1.msra.mxu0 0.0
        %1212 = vmatprep.subr.mxu0 0.0
        %1213 = vmatpush1.msra.mxu0 0.0
        %1214 = vmatprep.subr.mxu0 0.0
        %1215 = vmatpush1.msra.mxu0 0.0
        %1216 = vmatprep.subr.mxu0 0.0
        %1217 = vmatpush1.msra.mxu0 0.0
        %1218 = vmatprep.subr.mxu0 0.0
        %1219 = vmatpush1.msra.mxu0 0.0
        %1220 = vmatprep.subr.mxu0 0.0
        %1221 = vmatpush1.msra.mxu0 0.0
        %1222 = vmatprep.subr.mxu0 0.0
        %1223 = vmatpush1.msra.mxu0 0.0
        %1224 = vmatprep.subr.mxu0 0.0
        %1225 = vmatpush1.msra.mxu0 0.0
        %1226 = vmatprep.subr.mxu0 0.0
        %1227 = vmatpush1.msra.mxu0 0.0
        %1228 = vmatprep.subr.mxu0 0.0
        %1229 = vmatpush1.msra.mxu0 0.0
        %1230 = vmatprep.subr.mxu0 0.0
        %1231 = vmatpush1.msra.mxu0 0.0
        %1232 = vmatprep.subr.mxu0 0.0
        %1233 = vmatpush1.msra.mxu0 0.0
        %1234 = vmatprep.subr.mxu0 0.0
        %1235 = vmatpush1.msra.mxu0 0.0
        %1236 = vmatprep.subr.mxu0 0.0
        %1237 = vmatpush1.msra.mxu0 0.0
        %1238 = vmatprep.subr.mxu0 0.0
        %1239 = vmatpush1.msra.mxu0 0.0
        %1240 = vmatprep.subr.mxu0 0.0
        %1241 = vmatpush1.msra.mxu0 0.0
        %1242 = vmatprep.subr.mxu0 0.0
        %1243 = vmatpush1.msra.mxu0 0.0
        %1244 = vmatprep.subr.mxu0 0.0
        %1245 = vmatpush1.msra.mxu0 0.0
        %1246 = vmatprep.subr.mxu0 0.0
        %1247 = vmatpush1.msra.mxu0 0.0
        %1248 = vmatprep.mubr.f32.mxu0 0.0
        %v1249 = vand.u32 %v1178, 4294901760
        %v1250 = vsub.f32 %v1178, %v1249
        %v1251 = vand.u32 %v1250, 4294901760
        %v1252 = vsub.f32 %v1250, %v1251
        %v1253 = vand.u32 %v1252, 4294901760
        %1254 = vmatmul.mubr.f32.gmra.mrb[0].mxu0 %v1253
        %v1255 = vpop.f32.mrb[0].mxu0
        %v1256 = vadd.f32 %v1175, %v1255
        %v1257 = vpop.f32.mrb[0].mxu0
        %1258 = vdwg.mxu0
        %1259 = vmatprep.subr.mxu0 0.0
        %v1260 = vand.u32 %v1167, 4294901760
        %v1261 = vsub.f32 %v1167, %v1260
        %v1262 = vand.u32 %v1261, 4294901760
        %v1263 = vsub.f32 %v1261, %v1262
        %v1264 = vand.u32 %v1263, 4294901760
        %1265 = vmatpush1.msra.mxu0 %v1264
        %1266 = vmatprep.subr.mxu0 0.0
        %v1267 = vand.u32 %v1168, 4294901760
        %v1268 = vsub.f32 %v1168, %v1267
        %v1269 = vand.u32 %v1268, 4294901760
        %v1270 = vsub.f32 %v1268, %v1269
        %v1271 = vand.u32 %v1270, 4294901760
        %1272 = vmatpush1.msra.mxu0 %v1271
        %1273 = vmatprep.subr.mxu0 0.0
        %v1274 = vand.u32 %v1169, 4294901760
        %v1275 = vsub.f32 %v1169, %v1274
        %v1276 = vand.u32 %v1275, 4294901760
        %v1277 = vsub.f32 %v1275, %v1276
        %v1278 = vand.u32 %v1277, 4294901760
        %1279 = vmatpush1.msra.mxu0 %v1278
        %1280 = vmatprep.subr.mxu0 0.0
        %v1281 = vand.u32 %v1170, 4294901760
        %v1282 = vsub.f32 %v1170, %v1281
        %v1283 = vand.u32 %v1282, 4294901760
        %v1284 = vsub.f32 %v1282, %v1283
        %v1285 = vand.u32 %v1284, 4294901760
        %1286 = vmatpush1.msra.mxu0 %v1285
        %1287 = vmatprep.subr.mxu0 0.0
        %1288 = vmatpush1.msra.mxu0 0.0
        %1289 = vmatprep.subr.mxu0 0.0
        %1290 = vmatpush1.msra.mxu0 0.0
        %1291 = vmatprep.subr.mxu0 0.0
        %1292 = vmatpush1.msra.mxu0 0.0
        %1293 = vmatprep.subr.mxu0 0.0
        %1294 = vmatpush1.msra.mxu0 0.0
        %1295 = vmatprep.subr.mxu0 0.0
        %1296 = vmatpush1.msra.mxu0 0.0
        %1297 = vmatprep.subr.mxu0 0.0
        %1298 = vmatpush1.msra.mxu0 0.0
        %1299 = vmatprep.subr.mxu0 0.0
        %1300 = vmatpush1.msra.mxu0 0.0
        %1301 = vmatprep.subr.mxu0 0.0
        %1302 = vmatpush1.msra.mxu0 0.0
        %1303 = vmatprep.subr.mxu0 0.0
        %1304 = vmatpush1.msra.mxu0 0.0
        %1305 = vmatprep.subr.mxu0 0.0
        %1306 = vmatpush1.msra.mxu0 0.0
        %1307 = vmatprep.subr.mxu0 0.0
        %1308 = vmatpush1.msra.mxu0 0.0
        %1309 = vmatprep.subr.mxu0 0.0
        %1310 = vmatpush1.msra.mxu0 0.0
        %1311 = vmatprep.subr.mxu0 0.0
        %1312 = vmatpush1.msra.mxu0 0.0
        %1313 = vmatprep.subr.mxu0 0.0
        %1314 = vmatpush1.msra.mxu0 0.0
        %1315 = vmatprep.subr.mxu0 0.0
        %1316 = vmatpush1.msra.mxu0 0.0
        %1317 = vmatprep.subr.mxu0 0.0
        %1318 = vmatpush1.msra.mxu0 0.0
        %1319 = vmatprep.subr.mxu0 0.0
        %1320 = vmatpush1.msra.mxu0 0.0
        %1321 = vmatprep.subr.mxu0 0.0
        %1322 = vmatpush1.msra.mxu0 0.0
        %1323 = vmatprep.subr.mxu0 0.0
        %1324 = vmatpush1.msra.mxu0 0.0
        %1325 = vmatprep.subr.mxu0 0.0
        %1326 = vmatpush1.msra.mxu0 0.0
        %1327 = vmatprep.subr.mxu0 0.0
        %1328 = vmatpush1.msra.mxu0 0.0
        %1329 = vmatprep.subr.mxu0 0.0
        %1330 = vmatpush1.msra.mxu0 0.0
        %1331 = vmatprep.subr.mxu0 0.0
        %1332 = vmatpush1.msra.mxu0 0.0
        %1333 = vmatprep.subr.mxu0 0.0
        %1334 = vmatpush1.msra.mxu0 0.0
        %1335 = vmatprep.subr.mxu0 0.0
        %1336 = vmatpush1.msra.mxu0 0.0
        %1337 = vmatprep.subr.mxu0 0.0
        %1338 = vmatpush1.msra.mxu0 0.0
        %1339 = vmatprep.subr.mxu0 0.0
        %1340 = vmatpush1.msra.mxu0 0.0
        %1341 = vmatprep.subr.mxu0 0.0
        %1342 = vmatpush1.msra.mxu0 0.0
        %1343 = vmatprep.mubr.f32.mxu0 0.0
        %v1344 = vand.u32 %v1178, 4294901760
        %1345 = vmatmul.mubr.f32.gmra.mrb[0].mxu0 %v1344
        %v1346 = vpop.f32.mrb[0].mxu0
        %v1347 = vadd.f32 %v1256, %v1346
        %v1348 = vpop.f32.mrb[0].mxu0
        %1349 = vdwg.mxu0
        %1350 = vmatprep.subr.mxu0 0.0
        %v1351 = vand.u32 %v1167, 4294901760
        %v1352 = vsub.f32 %v1167, %v1351
        %1353 = vmatpush1.msra.mxu0 %v1352
        %1354 = vmatprep.subr.mxu0 0.0
        %v1355 = vand.u32 %v1168, 4294901760
        %v1356 = vsub.f32 %v1168, %v1355
        %1357 = vmatpush1.msra.mxu0 %v1356
        %1358 = vmatprep.subr.mxu0 0.0
        %v1359 = vand.u32 %v1169, 4294901760
        %v1360 = vsub.f32 %v1169, %v1359
        %1361 = vmatpush1.msra.mxu0 %v1360
        %1362 = vmatprep.subr.mxu0 0.0
        %v1363 = vand.u32 %v1170, 4294901760
        %v1364 = vsub.f32 %v1170, %v1363
        %1365 = vmatpush1.msra.mxu0 %v1364
        %1366 = vmatprep.subr.mxu0 0.0
        %1367 = vmatpush1.msra.mxu0 0.0
        %1368 = vmatprep.subr.mxu0 0.0
        %1369 = vmatpush1.msra.mxu0 0.0
        %1370 = vmatprep.subr.mxu0 0.0
        %1371 = vmatpush1.msra.mxu0 0.0
        %1372 = vmatprep.subr.mxu0 0.0
        %1373 = vmatpush1.msra.mxu0 0.0
        %1374 = vmatprep.subr.mxu0 0.0
        %1375 = vmatpush1.msra.mxu0 0.0
        %1376 = vmatprep.subr.mxu0 0.0
        %1377 = vmatpush1.msra.mxu0 0.0
        %1378 = vmatprep.subr.mxu0 0.0
        %1379 = vmatpush1.msra.mxu0 0.0
        %1380 = vmatprep.subr.mxu0 0.0
        %1381 = vmatpush1.msra.mxu0 0.0
        %1382 = vmatprep.subr.mxu0 0.0
        %1383 = vmatpush1.msra.mxu0 0.0
        %1384 = vmatprep.subr.mxu0 0.0
        %1385 = vmatpush1.msra.mxu0 0.0
        %1386 = vmatprep.subr.mxu0 0.0
        %1387 = vmatpush1.msra.mxu0 0.0
        %1388 = vmatprep.subr.mxu0 0.0
        %1389 = vmatpush1.msra.mxu0 0.0
        %1390 = vmatprep.subr.mxu0 0.0
        %1391 = vmatpush1.msra.mxu0 0.0
        %1392 = vmatprep.subr.mxu0 0.0
        %1393 = vmatpush1.msra.mxu0 0.0
        %1394 = vmatprep.subr.mxu0 0.0
        %1395 = vmatpush1.msra.mxu0 0.0
        %1396 = vmatprep.subr.mxu0 0.0
        %1397 = vmatpush1.msra.mxu0 0.0
        %1398 = vmatprep.subr.mxu0 0.0
        %1399 = vmatpush1.msra.mxu0 0.0
        %1400 = vmatprep.subr.mxu0 0.0
        %1401 = vmatpush1.msra.mxu0 0.0
        %1402 = vmatprep.subr.mxu0 0.0
        %1403 = vmatpush1.msra.mxu0 0.0
        %1404 = vmatprep.subr.mxu0 0.0
        %1405 = vmatpush1.msra.mxu0 0.0
        %1406 = vmatprep.subr.mxu0 0.0
        %1407 = vmatpush1.msra.mxu0 0.0
        %1408 = vmatprep.subr.mxu0 0.0
        %1409 = vmatpush1.msra.mxu0 0.0
        %1410 = vmatprep.subr.mxu0 0.0
        %1411 = vmatpush1.msra.mxu0 0.0
        %1412 = vmatprep.subr.mxu0 0.0
        %1413 = vmatpush1.msra.mxu0 0.0
        %1414 = vmatprep.subr.mxu0 0.0
        %1415 = vmatpush1.msra.mxu0 0.0
        %1416 = vmatprep.subr.mxu0 0.0
        %1417 = vmatpush1.msra.mxu0 0.0
        %1418 = vmatprep.subr.mxu0 0.0
        %1419 = vmatpush1.msra.mxu0 0.0
        %1420 = vmatprep.subr.mxu0 0.0
        %1421 = vmatpush1.msra.mxu0 0.0
        %1422 = vmatprep.mubr.f32.mxu0 0.0
        %v1423 = vand.u32 %v1178, 4294901760
        %v1424 = vsub.f32 %v1178, %v1423
        %1425 = vmatmul.mubr.f32.gmra.mrb[0].mxu0 %v1424
        %v1426 = vpop.f32.mrb[0].mxu0
        %v1427 = vadd.f32 %v1347, %v1426
        %v1428 = vpop.f32.mrb[0].mxu0
        %1429 = vdwg.mxu0
        %1430 = vmatprep.subr.mxu0 0.0
        %v1431 = vand.u32 %v1167, 4294901760
        %1432 = vmatpush1.msra.mxu0 %v1431
        %1433 = vmatprep.subr.mxu0 0.0
        %v1434 = vand.u32 %v1168, 4294901760
        %1435 = vmatpush1.msra.mxu0 %v1434
        %1436 = vmatprep.subr.mxu0 0.0
        %v1437 = vand.u32 %v1169, 4294901760
        %1438 = vmatpush1.msra.mxu0 %v1437
        %1439 = vmatprep.subr.mxu0 0.0
        %v1440 = vand.u32 %v1170, 4294901760
        %1441 = vmatpush1.msra.mxu0 %v1440
        %1442 = vmatprep.subr.mxu0 0.0
        %1443 = vmatpush1.msra.mxu0 0.0
        %1444 = vmatprep.subr.mxu0 0.0
        %1445 = vmatpush1.msra.mxu0 0.0
        %1446 = vmatprep.subr.mxu0 0.0
        %1447 = vmatpush1.msra.mxu0 0.0
        %1448 = vmatprep.subr.mxu0 0.0
        %1449 = vmatpush1.msra.mxu0 0.0
        %1450 = vmatprep.subr.mxu0 0.0
        %1451 = vmatpush1.msra.mxu0 0.0
        %1452 = vmatprep.subr.mxu0 0.0
        %1453 = vmatpush1.msra.mxu0 0.0
        %1454 = vmatprep.subr.mxu0 0.0
        %1455 = vmatpush1.msra.mxu0 0.0
        %1456 = vmatprep.subr.mxu0 0.0
        %1457 = vmatpush1.msra.mxu0 0.0
        %1458 = vmatprep.subr.mxu0 0.0
        %1459 = vmatpush1.msra.mxu0 0.0
        %1460 = vmatprep.subr.mxu0 0.0
        %1461 = vmatpush1.msra.mxu0 0.0
        %1462 = vmatprep.subr.mxu0 0.0
        %1463 = vmatpush1.msra.mxu0 0.0
        %1464 = vmatprep.subr.mxu0 0.0
        %1465 = vmatpush1.msra.mxu0 0.0
        %1466 = vmatprep.subr.mxu0 0.0
        %1467 = vmatpush1.msra.mxu0 0.0
        %1468 = vmatprep.subr.mxu0 0.0
        %1469 = vmatpush1.msra.mxu0 0.0
        %1470 = vmatprep.subr.mxu0 0.0
        %1471 = vmatpush1.msra.mxu0 0.0
        %1472 = vmatprep.subr.mxu0 0.0
        %1473 = vmatpush1.msra.mxu0 0.0
        %1474 = vmatprep.subr.mxu0 0.0
        %1475 = vmatpush1.msra.mxu0 0.0
        %1476 = vmatprep.subr.mxu0 0.0
        %1477 = vmatpush1.msra.mxu0 0.0
        %1478 = vmatprep.subr.mxu0 0.0
        %1479 = vmatpush1.msra.mxu0 0.0
        %1480 = vmatprep.subr.mxu0 0.0
        %1481 = vmatpush1.msra.mxu0 0.0
        %1482 = vmatprep.subr.mxu0 0.0
        %1483 = vmatpush1.msra.mxu0 0.0
        %1484 = vmatprep.subr.mxu0 0.0
        %1485 = vmatpush1.msra.mxu0 0.0
        %1486 = vmatprep.subr.mxu0 0.0
        %1487 = vmatpush1.msra.mxu0 0.0
        %1488 = vmatprep.subr.mxu0 0.0
        %1489 = vmatpush1.msra.mxu0 0.0
        %1490 = vmatprep.subr.mxu0 0.0
        %1491 = vmatpush1.msra.mxu0 0.0
        %1492 = vmatprep.subr.mxu0 0.0
        %1493 = vmatpush1.msra.mxu0 0.0
        %1494 = vmatprep.subr.mxu0 0.0
        %1495 = vmatpush1.msra.mxu0 0.0
        %1496 = vmatprep.subr.mxu0 0.0
        %1497 = vmatpush1.msra.mxu0 0.0
        %1498 = vmatprep.mubr.f32.mxu0 0.0
        %v1499 = vand.u32 %v1178, 4294901760
        %v1500 = vsub.f32 %v1178, %v1499
        %v1501 = vand.u32 %v1500, 4294901760
        %1502 = vmatmul.mubr.f32.gmra.mrb[0].mxu0 %v1501
        %v1503 = vpop.f32.mrb[0].mxu0
        %v1504 = vadd.f32 %v1427, %v1503
        %v1505 = vpop.f32.mrb[0].mxu0
        %1506 = vdwg.mxu0
        %1507 = vmatprep.subr.mxu0 0.0
        %v1508 = vand.u32 %v1167, 4294901760
        %v1509 = vsub.f32 %v1167, %v1508
        %v1510 = vand.u32 %v1509, 4294901760
        %1511 = vmatpush1.msra.mxu0 %v1510
        %1512 = vmatprep.subr.mxu0 0.0
        %v1513 = vand.u32 %v1168, 4294901760
        %v1514 = vsub.f32 %v1168, %v1513
        %v1515 = vand.u32 %v1514, 4294901760
        %1516 = vmatpush1.msra.mxu0 %v1515
        %1517 = vmatprep.subr.mxu0 0.0
        %v1518 = vand.u32 %v1169, 4294901760
        %v1519 = vsub.f32 %v1169, %v1518
        %v1520 = vand.u32 %v1519, 4294901760
        %1521 = vmatpush1.msra.mxu0 %v1520
        %1522 = vmatprep.subr.mxu0 0.0
        %v1523 = vand.u32 %v1170, 4294901760
        %v1524 = vsub.f32 %v1170, %v1523
        %v1525 = vand.u32 %v1524, 4294901760
        %1526 = vmatpush1.msra.mxu0 %v1525
        %1527 = vmatprep.subr.mxu0 0.0
        %1528 = vmatpush1.msra.mxu0 0.0
        %1529 = vmatprep.subr.mxu0 0.0
        %1530 = vmatpush1.msra.mxu0 0.0
        %1531 = vmatprep.subr.mxu0 0.0
        %1532 = vmatpush1.msra.mxu0 0.0
        %1533 = vmatprep.subr.mxu0 0.0
        %1534 = vmatpush1.msra.mxu0 0.0
        %1535 = vmatprep.subr.mxu0 0.0
        %1536 = vmatpush1.msra.mxu0 0.0
        %1537 = vmatprep.subr.mxu0 0.0
        %1538 = vmatpush1.msra.mxu0 0.0
        %1539 = vmatprep.subr.mxu0 0.0
        %1540 = vmatpush1.msra.mxu0 0.0
        %1541 = vmatprep.subr.mxu0 0.0
        %1542 = vmatpush1.msra.mxu0 0.0
        %1543 = vmatprep.subr.mxu0 0.0
        %1544 = vmatpush1.msra.mxu0 0.0
        %1545 = vmatprep.subr.mxu0 0.0
        %1546 = vmatpush1.msra.mxu0 0.0
        %1547 = vmatprep.subr.mxu0 0.0
        %1548 = vmatpush1.msra.mxu0 0.0
        %1549 = vmatprep.subr.mxu0 0.0
        %1550 = vmatpush1.msra.mxu0 0.0
        %1551 = vmatprep.subr.mxu0 0.0
        %1552 = vmatpush1.msra.mxu0 0.0
        %1553 = vmatprep.subr.mxu0 0.0
        %1554 = vmatpush1.msra.mxu0 0.0
        %1555 = vmatprep.subr.mxu0 0.0
        %1556 = vmatpush1.msra.mxu0 0.0
        %1557 = vmatprep.subr.mxu0 0.0
        %1558 = vmatpush1.msra.mxu0 0.0
        %1559 = vmatprep.subr.mxu0 0.0
        %1560 = vmatpush1.msra.mxu0 0.0
        %1561 = vmatprep.subr.mxu0 0.0
        %1562 = vmatpush1.msra.mxu0 0.0
        %1563 = vmatprep.subr.mxu0 0.0
        %1564 = vmatpush1.msra.mxu0 0.0
        %1565 = vmatprep.subr.mxu0 0.0
        %1566 = vmatpush1.msra.mxu0 0.0
        %1567 = vmatprep.subr.mxu0 0.0
        %1568 = vmatpush1.msra.mxu0 0.0
        %1569 = vmatprep.subr.mxu0 0.0
        %1570 = vmatpush1.msra.mxu0 0.0
        %1571 = vmatprep.subr.mxu0 0.0
        %1572 = vmatpush1.msra.mxu0 0.0
        %1573 = vmatprep.subr.mxu0 0.0
        %1574 = vmatpush1.msra.mxu0 0.0
        %1575 = vmatprep.subr.mxu0 0.0
        %1576 = vmatpush1.msra.mxu0 0.0
        %1577 = vmatprep.subr.mxu0 0.0
        %1578 = vmatpush1.msra.mxu0 0.0
        %1579 = vmatprep.subr.mxu0 0.0
        %1580 = vmatpush1.msra.mxu0 0.0
        %1581 = vmatprep.subr.mxu0 0.0
        %1582 = vmatpush1.msra.mxu0 0.0
        %1583 = vmatprep.mubr.f32.mxu0 0.0
        %v1584 = vand.u32 %v1178, 4294901760
        %1585 = vmatmul.mubr.f32.gmra.mrb[0].mxu0 %v1584
        %v1586 = vpop.f32.mrb[0].mxu0
        %v1587 = vadd.f32 %v1504, %v1586
        %v1588 = vpop.f32.mrb[0].mxu0
        %1589 = vdwg.mxu0
        %1590 = vmatprep.subr.mxu0 0.0
        %v1591 = vand.u32 %v1167, 4294901760
        %1592 = vmatpush1.msra.mxu0 %v1591
        %1593 = vmatprep.subr.mxu0 0.0
        %v1594 = vand.u32 %v1168, 4294901760
        %1595 = vmatpush1.msra.mxu0 %v1594
        %1596 = vmatprep.subr.mxu0 0.0
        %v1597 = vand.u32 %v1169, 4294901760
        %1598 = vmatpush1.msra.mxu0 %v1597
        %1599 = vmatprep.subr.mxu0 0.0
        %v1600 = vand.u32 %v1170, 4294901760
        %1601 = vmatpush1.msra.mxu0 %v1600
        %1602 = vmatprep.subr.mxu0 0.0
        %1603 = vmatpush1.msra.mxu0 0.0
        %1604 = vmatprep.subr.mxu0 0.0
        %1605 = vmatpush1.msra.mxu0 0.0
        %1606 = vmatprep.subr.mxu0 0.0
        %1607 = vmatpush1.msra.mxu0 0.0
        %1608 = vmatprep.subr.mxu0 0.0
        %1609 = vmatpush1.msra.mxu0 0.0
        %1610 = vmatprep.subr.mxu0 0.0
        %1611 = vmatpush1.msra.mxu0 0.0
        %1612 = vmatprep.subr.mxu0 0.0
        %1613 = vmatpush1.msra.mxu0 0.0
        %1614 = vmatprep.subr.mxu0 0.0
        %1615 = vmatpush1.msra.mxu0 0.0
        %1616 = vmatprep.subr.mxu0 0.0
        %1617 = vmatpush1.msra.mxu0 0.0
        %1618 = vmatprep.subr.mxu0 0.0
        %1619 = vmatpush1.msra.mxu0 0.0
        %1620 = vmatprep.subr.mxu0 0.0
        %1621 = vmatpush1.msra.mxu0 0.0
        %1622 = vmatprep.subr.mxu0 0.0
        %1623 = vmatpush1.msra.mxu0 0.0
        %1624 = vmatprep.subr.mxu0 0.0
        %1625 = vmatpush1.msra.mxu0 0.0
        %1626 = vmatprep.subr.mxu0 0.0
        %1627 = vmatpush1.msra.mxu0 0.0
        %1628 = vmatprep.subr.mxu0 0.0
        %1629 = vmatpush1.msra.mxu0 0.0
        %1630 = vmatprep.subr.mxu0 0.0
        %1631 = vmatpush1.msra.mxu0 0.0
        %1632 = vmatprep.subr.mxu0 0.0
        %1633 = vmatpush1.msra.mxu0 0.0
        %1634 = vmatprep.subr.mxu0 0.0
        %1635 = vmatpush1.msra.mxu0 0.0
        %1636 = vmatprep.subr.mxu0 0.0
        %1637 = vmatpush1.msra.mxu0 0.0
        %1638 = vmatprep.subr.mxu0 0.0
        %1639 = vmatpush1.msra.mxu0 0.0
        %1640 = vmatprep.subr.mxu0 0.0
        %1641 = vmatpush1.msra.mxu0 0.0
        %1642 = vmatprep.subr.mxu0 0.0
        %1643 = vmatpush1.msra.mxu0 0.0
        %1644 = vmatprep.subr.mxu0 0.0
        %1645 = vmatpush1.msra.mxu0 0.0
        %1646 = vmatprep.subr.mxu0 0.0
        %1647 = vmatpush1.msra.mxu0 0.0
        %1648 = vmatprep.subr.mxu0 0.0
        %1649 = vmatpush1.msra.mxu0 0.0
        %1650 = vmatprep.subr.mxu0 0.0
        %1651 = vmatpush1.msra.mxu0 0.0
        %1652 = vmatprep.subr.mxu0 0.0
        %1653 = vmatpush1.msra.mxu0 0.0
        %1654 = vmatprep.subr.mxu0 0.0
        %1655 = vmatpush1.msra.mxu0 0.0
        %1656 = vmatprep.subr.mxu0 0.0
        %1657 = vmatpush1.msra.mxu0 0.0
        %1658 = vmatprep.mubr.f32.mxu0 0.0
        %v1659 = vand.u32 %v1178, 4294901760
        %1660 = vmatmul.mubr.f32.gmra.mrb[0].mxu0 %v1659
        %v1661 = vpop.f32.mrb[0].mxu0
        %v1662 = vadd.f32 %v1587, %v1661
        %v1663 = vpop.f32.mrb[0].mxu0
        %1664 = vdwg.mxu0
        %v1665 = vmax.f32 %v1662, 0.0
        %vm1666 = vcmp.ne.f32.partialorder %v1662, %v1662
        %v1667 = vadd.f32 %v1662, 0.0
        %v1668 = vand.u32 2147483647, %v1662
        %v1669 = vsub.f32 0.0, %v1668
        %v1670 = vmul.f32 %v1669, 1.442695
        %v1671 = vpow.pop %v1670
        %v1672 = vadd.f32 %v1671, 1.0
        %v1673 = vlog2.pop %v1672
        %v1674 = vmul.f32 %v1673, 0.6931472
        %v1675 = vmul.f32 -0.5, %v1671
        %v1676 = vadd.f32 %v1675, 1.0
        %v1677 = vmul.f32 %v1676, %v1671
        %v1678 = vand.u32 2147483647, %v1671
        %vm1679 = vcmp.lt.f32.partialorder %v1678, 0.0004427343
        %v1680 = vsel %vm1679, %v1677, %v1674
        %v1681 = vadd.f32 %v1665, %v1680
        %v1682 = vsel %vm1666, %v1667, %v1681
        %v1683 = vlaneseq
        %v1684 = vand.u32 %v1683, 127
        %vm1685 = vcmp.lt.s32.totalorder %v1684, 16
        %v1686 = vsel %vm1685, %v1682, 0.0
        %1687 = vadd.xlane.f32.xlu0 %v1686
        %v1688 = vpop.xlane.xlu0 %1687
        %v1689 = vmul.f32 %v1688, 0.1
        %v1690 = vrcp.pop %v1689
        %v1691 = vmul.f32 %v1682, %v1690
        %v1692 = vsel %vm1685, %v1691, 0.0
        %v1693 = vld [vmem:[#allocation2 + $0x80] sm:$0xff]
        %v1694 = vld [vmem:[#allocation2 + $0x88] sm:$0xff]
        %v1695 = vld [vmem:[#allocation2 + $0x90] sm:$0xff]
        %v1696 = vld [vmem:[#allocation2 + $0x98] sm:$0xff]
        %v1697 = vld [vmem:[#allocation2 + $0xa0] sm:$0xff]
        %v1698 = vld [vmem:[#allocation2 + $0xa8] sm:$0xff]
        %v1699 = vld [vmem:[#allocation2 + $0xb0] sm:$0xff]
        %v1700 = vld [vmem:[#allocation2 + $0xb8] sm:$0xff]
        %v1701 = vld [vmem:[#allocation2 + $0xc0] sm:$0x1]
        %v1702 = vlaneseq
        %v1703 = vshrl.u32 %v1702, 7
        %v1704 = vsub.s32 0, %v1703
        %v1705 = vrot.slane %v1701, %v1704
        %1706 = vmatprep.subr.mxu0 0.0
        %v1707 = vand.u32 %v1693, 4294901760
        %1708 = vmatpush1.msra.mxu0 %v1707
        %1709 = vmatprep.subr.mxu0 0.0
        %v1710 = vand.u32 %v1694, 4294901760
        %1711 = vmatpush1.msra.mxu0 %v1710
        %1712 = vmatprep.subr.mxu0 0.0
        %v1713 = vand.u32 %v1695, 4294901760
        %1714 = vmatpush1.msra.mxu0 %v1713
        %1715 = vmatprep.subr.mxu0 0.0
        %v1716 = vand.u32 %v1696, 4294901760
        %1717 = vmatpush1.msra.mxu0 %v1716
        %1718 = vmatprep.subr.mxu0 0.0
        %v1719 = vand.u32 %v1697, 4294901760
        %1720 = vmatpush1.msra.mxu0 %v1719
        %1721 = vmatprep.subr.mxu0 0.0
        %v1722 = vand.u32 %v1698, 4294901760
        %1723 = vmatpush1.msra.mxu0 %v1722
        %1724 = vmatprep.subr.mxu0 0.0
        %v1725 = vand.u32 %v1699, 4294901760
        %1726 = vmatpush1.msra.mxu0 %v1725
        %1727 = vmatprep.subr.mxu0 0.0
        %v1728 = vand.u32 %v1700, 4294901760
        %1729 = vmatpush1.msra.mxu0 %v1728
        %1730 = vmatprep.subr.mxu0 0.0
        %1731 = vmatpush1.msra.mxu0 0.0
        %1732 = vmatprep.subr.mxu0 0.0
        %1733 = vmatpush1.msra.mxu0 0.0
        %1734 = vmatprep.subr.mxu0 0.0
        %1735 = vmatpush1.msra.mxu0 0.0
        %1736 = vmatprep.subr.mxu0 0.0
        %1737 = vmatpush1.msra.mxu0 0.0
        %1738 = vmatprep.subr.mxu0 0.0
        %1739 = vmatpush1.msra.mxu0 0.0
        %1740 = vmatprep.subr.mxu0 0.0
        %1741 = vmatpush1.msra.mxu0 0.0
        %1742 = vmatprep.subr.mxu0 0.0
        %1743 = vmatpush1.msra.mxu0 0.0
        %1744 = vmatprep.subr.mxu0 0.0
        %1745 = vmatpush1.msra.mxu0 0.0
        %1746 = vmatprep.subr.mxu0 0.0
        %1747 = vmatpush1.msra.mxu0 0.0
        %1748 = vmatprep.subr.mxu0 0.0
        %1749 = vmatpush1.msra.mxu0 0.0
        %1750 = vmatprep.subr.mxu0 0.0
        %1751 = vmatpush1.msra.mxu0 0.0
        %1752 = vmatprep.subr.mxu0 0.0
        %1753 = vmatpush1.msra.mxu0 0.0
        %1754 = vmatprep.subr.mxu0 0.0
        %1755 = vmatpush1.msra.mxu0 0.0
        %1756 = vmatprep.subr.mxu0 0.0
        %1757 = vmatpush1.msra.mxu0 0.0
        %1758 = vmatprep.subr.mxu0 0.0
        %1759 = vmatpush1.msra.mxu0 0.0
        %1760 = vmatprep.subr.mxu0 0.0
        %1761 = vmatpush1.msra.mxu0 0.0
        %1762 = vmatprep.subr.mxu0 0.0
        %1763 = vmatpush1.msra.mxu0 0.0
        %1764 = vmatprep.subr.mxu0 0.0
        %1765 = vmatpush1.msra.mxu0 0.0
        %1766 = vmatprep.subr.mxu0 0.0
        %1767 = vmatpush1.msra.mxu0 0.0
        %1768 = vmatprep.subr.mxu0 0.0
        %1769 = vmatpush1.msra.mxu0 0.0
        %1770 = vmatprep.subr.mxu0 0.0
        %1771 = vmatpush1.msra.mxu0 0.0
        %1772 = vmatprep.subr.mxu0 0.0
        %1773 = vmatpush1.msra.mxu0 0.0
        %1774 = vmatprep.subr.mxu0 0.0
        %1775 = vmatpush1.msra.mxu0 0.0
        %1776 = vmatprep.subr.mxu0 0.0
        %1777 = vmatpush1.msra.mxu0 0.0
        %1778 = vmatprep.mubr.f32.mxu0 0.0
        %v1779 = vand.u32 %v627, 4294901760
        %v1780 = vsub.f32 %v627, %v1779
        %v1781 = vand.u32 %v1780, 4294901760
        %v1782 = vsub.f32 %v1780, %v1781
        %v1783 = vand.u32 %v1782, 4294901760
        %1784 = vmatmul.mubr.f32.gmra.mrb[0].mxu0 %v1783
        %v1785 = vpop.f32.mrb[0].mxu0
        %v1786 = vadd.f32 %v1705, %v1785
        %v1787 = vpop.f32.mrb[0].mxu0
        %1788 = vdwg.mxu0
        %1789 = vmatprep.subr.mxu0 0.0
        %v1790 = vand.u32 %v1693, 4294901760
        %v1791 = vsub.f32 %v1693, %v1790
        %v1792 = vand.u32 %v1791, 4294901760
        %v1793 = vsub.f32 %v1791, %v1792
        %v1794 = vand.u32 %v1793, 4294901760
        %1795 = vmatpush1.msra.mxu0 %v1794
        %1796 = vmatprep.subr.mxu0 0.0
        %v1797 = vand.u32 %v1694, 4294901760
        %v1798 = vsub.f32 %v1694, %v1797
        %v1799 = vand.u32 %v1798, 4294901760
        %v1800 = vsub.f32 %v1798, %v1799
        %v1801 = vand.u32 %v1800, 4294901760
        %1802 = vmatpush1.msra.mxu0 %v1801
        %1803 = vmatprep.subr.mxu0 0.0
        %v1804 = vand.u32 %v1695, 4294901760
        %v1805 = vsub.f32 %v1695, %v1804
        %v1806 = vand.u32 %v1805, 4294901760
        %v1807 = vsub.f32 %v1805, %v1806
        %v1808 = vand.u32 %v1807, 4294901760
        %1809 = vmatpush1.msra.mxu0 %v1808
        %1810 = vmatprep.subr.mxu0 0.0
        %v1811 = vand.u32 %v1696, 4294901760
        %v1812 = vsub.f32 %v1696, %v1811
        %v1813 = vand.u32 %v1812, 4294901760
        %v1814 = vsub.f32 %v1812, %v1813
        %v1815 = vand.u32 %v1814, 4294901760
        %1816 = vmatpush1.msra.mxu0 %v1815
        %1817 = vmatprep.subr.mxu0 0.0
        %v1818 = vand.u32 %v1697, 4294901760
        %v1819 = vsub.f32 %v1697, %v1818
        %v1820 = vand.u32 %v1819, 4294901760
        %v1821 = vsub.f32 %v1819, %v1820
        %v1822 = vand.u32 %v1821, 4294901760
        %1823 = vmatpush1.msra.mxu0 %v1822
        %1824 = vmatprep.subr.mxu0 0.0
        %v1825 = vand.u32 %v1698, 4294901760
        %v1826 = vsub.f32 %v1698, %v1825
        %v1827 = vand.u32 %v1826, 4294901760
        %v1828 = vsub.f32 %v1826, %v1827
        %v1829 = vand.u32 %v1828, 4294901760
        %1830 = vmatpush1.msra.mxu0 %v1829
        %1831 = vmatprep.subr.mxu0 0.0
        %v1832 = vand.u32 %v1699, 4294901760
        %v1833 = vsub.f32 %v1699, %v1832
        %v1834 = vand.u32 %v1833, 4294901760
        %v1835 = vsub.f32 %v1833, %v1834
        %v1836 = vand.u32 %v1835, 4294901760
        %1837 = vmatpush1.msra.mxu0 %v1836
        %1838 = vmatprep.subr.mxu0 0.0
        %v1839 = vand.u32 %v1700, 4294901760
        %v1840 = vsub.f32 %v1700, %v1839
        %v1841 = vand.u32 %v1840, 4294901760
        %v1842 = vsub.f32 %v1840, %v1841
        %v1843 = vand.u32 %v1842, 4294901760
        %1844 = vmatpush1.msra.mxu0 %v1843
        %1845 = vmatprep.subr.mxu0 0.0
        %1846 = vmatpush1.msra.mxu0 0.0
        %1847 = vmatprep.subr.mxu0 0.0
        %1848 = vmatpush1.msra.mxu0 0.0
        %1849 = vmatprep.subr.mxu0 0.0
        %1850 = vmatpush1.msra.mxu0 0.0
        %1851 = vmatprep.subr.mxu0 0.0
        %1852 = vmatpush1.msra.mxu0 0.0
        %1853 = vmatprep.subr.mxu0 0.0
        %1854 = vmatpush1.msra.mxu0 0.0
        %1855 = vmatprep.subr.mxu0 0.0
        %1856 = vmatpush1.msra.mxu0 0.0
        %1857 = vmatprep.subr.mxu0 0.0
        %1858 = vmatpush1.msra.mxu0 0.0
        %1859 = vmatprep.subr.mxu0 0.0
        %1860 = vmatpush1.msra.mxu0 0.0
        %1861 = vmatprep.subr.mxu0 0.0
        %1862 = vmatpush1.msra.mxu0 0.0
        %1863 = vmatprep.subr.mxu0 0.0
        %1864 = vmatpush1.msra.mxu0 0.0
        %1865 = vmatprep.subr.mxu0 0.0
        %1866 = vmatpush1.msra.mxu0 0.0
        %1867 = vmatprep.subr.mxu0 0.0
        %1868 = vmatpush1.msra.mxu0 0.0
        %1869 = vmatprep.subr.mxu0 0.0
        %1870 = vmatpush1.msra.mxu0 0.0
        %1871 = vmatprep.subr.mxu0 0.0
        %1872 = vmatpush1.msra.mxu0 0.0
        %1873 = vmatprep.subr.mxu0 0.0
        %1874 = vmatpush1.msra.mxu0 0.0
        %1875 = vmatprep.subr.mxu0 0.0
        %1876 = vmatpush1.msra.mxu0 0.0
        %1877 = vmatprep.subr.mxu0 0.0
        %1878 = vmatpush1.msra.mxu0 0.0
        %1879 = vmatprep.subr.mxu0 0.0
        %1880 = vmatpush1.msra.mxu0 0.0
        %1881 = vmatprep.subr.mxu0 0.0
        %1882 = vmatpush1.msra.mxu0 0.0
        %1883 = vmatprep.subr.mxu0 0.0
        %1884 = vmatpush1.msra.mxu0 0.0
        %1885 = vmatprep.subr.mxu0 0.0
        %1886 = vmatpush1.msra.mxu0 0.0
        %1887 = vmatprep.subr.mxu0 0.0
        %1888 = vmatpush1.msra.mxu0 0.0
        %1889 = vmatprep.subr.mxu0 0.0
        %1890 = vmatpush1.msra.mxu0 0.0
        %1891 = vmatprep.subr.mxu0 0.0
        %1892 = vmatpush1.msra.mxu0 0.0
        %1893 = vmatprep.mubr.f32.mxu0 0.0
        %v1894 = vand.u32 %v627, 4294901760
        %1895 = vmatmul.mubr.f32.gmra.mrb[0].mxu0 %v1894
        %v1896 = vpop.f32.mrb[0].mxu0
        %v1897 = vadd.f32 %v1786, %v1896
        %v1898 = vpop.f32.mrb[0].mxu0
        %1899 = vdwg.mxu0
        %1900 = vmatprep.subr.mxu0 0.0
        %v1901 = vand.u32 %v1693, 4294901760
        %v1902 = vsub.f32 %v1693, %v1901
        %1903 = vmatpush1.msra.mxu0 %v1902
        %1904 = vmatprep.subr.mxu0 0.0
        %v1905 = vand.u32 %v1694, 4294901760
        %v1906 = vsub.f32 %v1694, %v1905
        %1907 = vmatpush1.msra.mxu0 %v1906
        %1908 = vmatprep.subr.mxu0 0.0
        %v1909 = vand.u32 %v1695, 4294901760
        %v1910 = vsub.f32 %v1695, %v1909
        %1911 = vmatpush1.msra.mxu0 %v1910
        %1912 = vmatprep.subr.mxu0 0.0
        %v1913 = vand.u32 %v1696, 4294901760
        %v1914 = vsub.f32 %v1696, %v1913
        %1915 = vmatpush1.msra.mxu0 %v1914
        %1916 = vmatprep.subr.mxu0 0.0
        %v1917 = vand.u32 %v1697, 4294901760
        %v1918 = vsub.f32 %v1697, %v1917
        %1919 = vmatpush1.msra.mxu0 %v1918
        %1920 = vmatprep.subr.mxu0 0.0
        %v1921 = vand.u32 %v1698, 4294901760
        %v1922 = vsub.f32 %v1698, %v1921
        %1923 = vmatpush1.msra.mxu0 %v1922
        %1924 = vmatprep.subr.mxu0 0.0
        %v1925 = vand.u32 %v1699, 4294901760
        %v1926 = vsub.f32 %v1699, %v1925
        %1927 = vmatpush1.msra.mxu0 %v1926
        %1928 = vmatprep.subr.mxu0 0.0
        %v1929 = vand.u32 %v1700, 4294901760
        %v1930 = vsub.f32 %v1700, %v1929
        %1931 = vmatpush1.msra.mxu0 %v1930
        %1932 = vmatprep.subr.mxu0 0.0
        %1933 = vmatpush1.msra.mxu0 0.0
        %1934 = vmatprep.subr.mxu0 0.0
        %1935 = vmatpush1.msra.mxu0 0.0
        %1936 = vmatprep.subr.mxu0 0.0
        %1937 = vmatpush1.msra.mxu0 0.0
        %1938 = vmatprep.subr.mxu0 0.0
        %1939 = vmatpush1.msra.mxu0 0.0
        %1940 = vmatprep.subr.mxu0 0.0
        %1941 = vmatpush1.msra.mxu0 0.0
        %1942 = vmatprep.subr.mxu0 0.0
        %1943 = vmatpush1.msra.mxu0 0.0
        %1944 = vmatprep.subr.mxu0 0.0
        %1945 = vmatpush1.msra.mxu0 0.0
        %1946 = vmatprep.subr.mxu0 0.0
        %1947 = vmatpush1.msra.mxu0 0.0
        %1948 = vmatprep.subr.mxu0 0.0
        %1949 = vmatpush1.msra.mxu0 0.0
        %1950 = vmatprep.subr.mxu0 0.0
        %1951 = vmatpush1.msra.mxu0 0.0
        %1952 = vmatprep.subr.mxu0 0.0
        %1953 = vmatpush1.msra.mxu0 0.0
        %1954 = vmatprep.subr.mxu0 0.0
        %1955 = vmatpush1.msra.mxu0 0.0
        %1956 = vmatprep.subr.mxu0 0.0
        %1957 = vmatpush1.msra.mxu0 0.0
        %1958 = vmatprep.subr.mxu0 0.0
        %1959 = vmatpush1.msra.mxu0 0.0
        %1960 = vmatprep.subr.mxu0 0.0
        %1961 = vmatpush1.msra.mxu0 0.0
        %1962 = vmatprep.subr.mxu0 0.0
        %1963 = vmatpush1.msra.mxu0 0.0
        %1964 = vmatprep.subr.mxu0 0.0
        %1965 = vmatpush1.msra.mxu0 0.0
        %1966 = vmatprep.subr.mxu0 0.0
        %1967 = vmatpush1.msra.mxu0 0.0
        %1968 = vmatprep.subr.mxu0 0.0
        %1969 = vmatpush1.msra.mxu0 0.0
        %1970 = vmatprep.subr.mxu0 0.0
        %1971 = vmatpush1.msra.mxu0 0.0
        %1972 = vmatprep.subr.mxu0 0.0
        %1973 = vmatpush1.msra.mxu0 0.0
        %1974 = vmatprep.subr.mxu0 0.0
        %1975 = vmatpush1.msra.mxu0 0.0
        %1976 = vmatprep.subr.mxu0 0.0
        %1977 = vmatpush1.msra.mxu0 0.0
        %1978 = vmatprep.subr.mxu0 0.0
        %1979 = vmatpush1.msra.mxu0 0.0
        %1980 = vmatprep.mubr.f32.mxu0 0.0
        %v1981 = vand.u32 %v627, 4294901760
        %v1982 = vsub.f32 %v627, %v1981
        %1983 = vmatmul.mubr.f32.gmra.mrb[0].mxu0 %v1982
        %v1984 = vpop.f32.mrb[0].mxu0
        %v1985 = vadd.f32 %v1897, %v1984
        %v1986 = vpop.f32.mrb[0].mxu0
        %1987 = vdwg.mxu0
        %1988 = vmatprep.subr.mxu0 0.0
        %v1989 = vand.u32 %v1693, 4294901760
        %1990 = vmatpush1.msra.mxu0 %v1989
        %1991 = vmatprep.subr.mxu0 0.0
        %v1992 = vand.u32 %v1694, 4294901760
        %1993 = vmatpush1.msra.mxu0 %v1992
        %1994 = vmatprep.subr.mxu0 0.0
        %v1995 = vand.u32 %v1695, 4294901760
        %1996 = vmatpush1.msra.mxu0 %v1995
        %1997 = vmatprep.subr.mxu0 0.0
        %v1998 = vand.u32 %v1696, 4294901760
        %1999 = vmatpush1.msra.mxu0 %v1998
        %2000 = vmatprep.subr.mxu0 0.0
        %v2001 = vand.u32 %v1697, 4294901760
        %2002 = vmatpush1.msra.mxu0 %v2001
        %2003 = vmatprep.subr.mxu0 0.0
        %v2004 = vand.u32 %v1698, 4294901760
        %2005 = vmatpush1.msra.mxu0 %v2004
        %2006 = vmatprep.subr.mxu0 0.0
        %v2007 = vand.u32 %v1699, 4294901760
        %2008 = vmatpush1.msra.mxu0 %v2007
        %2009 = vmatprep.subr.mxu0 0.0
        %v2010 = vand.u32 %v1700, 4294901760
        %2011 = vmatpush1.msra.mxu0 %v2010
        %2012 = vmatprep.subr.mxu0 0.0
        %2013 = vmatpush1.msra.mxu0 0.0
        %2014 = vmatprep.subr.mxu0 0.0
        %2015 = vmatpush1.msra.mxu0 0.0
        %2016 = vmatprep.subr.mxu0 0.0
        %2017 = vmatpush1.msra.mxu0 0.0
        %2018 = vmatprep.subr.mxu0 0.0
        %2019 = vmatpush1.msra.mxu0 0.0
        %2020 = vmatprep.subr.mxu0 0.0
        %2021 = vmatpush1.msra.mxu0 0.0
        %2022 = vmatprep.subr.mxu0 0.0
        %2023 = vmatpush1.msra.mxu0 0.0
        %2024 = vmatprep.subr.mxu0 0.0
        %2025 = vmatpush1.msra.mxu0 0.0
        %2026 = vmatprep.subr.mxu0 0.0
        %2027 = vmatpush1.msra.mxu0 0.0
        %2028 = vmatprep.subr.mxu0 0.0
        %2029 = vmatpush1.msra.mxu0 0.0
        %2030 = vmatprep.subr.mxu0 0.0
        %2031 = vmatpush1.msra.mxu0 0.0
        %2032 = vmatprep.subr.mxu0 0.0
        %2033 = vmatpush1.msra.mxu0 0.0
        %2034 = vmatprep.subr.mxu0 0.0
        %2035 = vmatpush1.msra.mxu0 0.0
        %2036 = vmatprep.subr.mxu0 0.0
        %2037 = vmatpush1.msra.mxu0 0.0
        %2038 = vmatprep.subr.mxu0 0.0
        %2039 = vmatpush1.msra.mxu0 0.0
        %2040 = vmatprep.subr.mxu0 0.0
        %2041 = vmatpush1.msra.mxu0 0.0
        %2042 = vmatprep.subr.mxu0 0.0
        %2043 = vmatpush1.msra.mxu0 0.0
        %2044 = vmatprep.subr.mxu0 0.0
        %2045 = vmatpush1.msra.mxu0 0.0
        %2046 = vmatprep.subr.mxu0 0.0
        %2047 = vmatpush1.msra.mxu0 0.0
        %2048 = vmatprep.subr.mxu0 0.0
        %2049 = vmatpush1.msra.mxu0 0.0
        %2050 = vmatprep.subr.mxu0 0.0
        %2051 = vmatpush1.msra.mxu0 0.0
        %2052 = vmatprep.subr.mxu0 0.0
        %2053 = vmatpush1.msra.mxu0 0.0
        %2054 = vmatprep.subr.mxu0 0.0
        %2055 = vmatpush1.msra.mxu0 0.0
        %2056 = vmatprep.subr.mxu0 0.0
        %2057 = vmatpush1.msra.mxu0 0.0
        %2058 = vmatprep.subr.mxu0 0.0
        %2059 = vmatpush1.msra.mxu0 0.0
        %2060 = vmatprep.mubr.f32.mxu0 0.0
        %v2061 = vand.u32 %v627, 4294901760
        %v2062 = vsub.f32 %v627, %v2061
        %v2063 = vand.u32 %v2062, 4294901760
        %2064 = vmatmul.mubr.f32.gmra.mrb[0].mxu0 %v2063
        %v2065 = vpop.f32.mrb[0].mxu0
        %v2066 = vadd.f32 %v1985, %v2065
        %v2067 = vpop.f32.mrb[0].mxu0
        %2068 = vdwg.mxu0
        %2069 = vmatprep.subr.mxu0 0.0
        %v2070 = vand.u32 %v1693, 4294901760
        %v2071 = vsub.f32 %v1693, %v2070
        %v2072 = vand.u32 %v2071, 4294901760
        %2073 = vmatpush1.msra.mxu0 %v2072
        %2074 = vmatprep.subr.mxu0 0.0
        %v2075 = vand.u32 %v1694, 4294901760
        %v2076 = vsub.f32 %v1694, %v2075
        %v2077 = vand.u32 %v2076, 4294901760
        %2078 = vmatpush1.msra.mxu0 %v2077
        %2079 = vmatprep.subr.mxu0 0.0
        %v2080 = vand.u32 %v1695, 4294901760
        %v2081 = vsub.f32 %v1695, %v2080
        %v2082 = vand.u32 %v2081, 4294901760
        %2083 = vmatpush1.msra.mxu0 %v2082
        %2084 = vmatprep.subr.mxu0 0.0
        %v2085 = vand.u32 %v1696, 4294901760
        %v2086 = vsub.f32 %v1696, %v2085
        %v2087 = vand.u32 %v2086, 4294901760
        %2088 = vmatpush1.msra.mxu0 %v2087
        %2089 = vmatprep.subr.mxu0 0.0
        %v2090 = vand.u32 %v1697, 4294901760
        %v2091 = vsub.f32 %v1697, %v2090
        %v2092 = vand.u32 %v2091, 4294901760
        %2093 = vmatpush1.msra.mxu0 %v2092
        %2094 = vmatprep.subr.mxu0 0.0
        %v2095 = vand.u32 %v1698, 4294901760
        %v2096 = vsub.f32 %v1698, %v2095
        %v2097 = vand.u32 %v2096, 4294901760
        %2098 = vmatpush1.msra.mxu0 %v2097
        %2099 = vmatprep.subr.mxu0 0.0
        %v2100 = vand.u32 %v1699, 4294901760
        %v2101 = vsub.f32 %v1699, %v2100
        %v2102 = vand.u32 %v2101, 4294901760
        %2103 = vmatpush1.msra.mxu0 %v2102
        %2104 = vmatprep.subr.mxu0 0.0
        %v2105 = vand.u32 %v1700, 4294901760
        %v2106 = vsub.f32 %v1700, %v2105
        %v2107 = vand.u32 %v2106, 4294901760
        %2108 = vmatpush1.msra.mxu0 %v2107
        %2109 = vmatprep.subr.mxu0 0.0
        %2110 = vmatpush1.msra.mxu0 0.0
        %2111 = vmatprep.subr.mxu0 0.0
        %2112 = vmatpush1.msra.mxu0 0.0
        %2113 = vmatprep.subr.mxu0 0.0
        %2114 = vmatpush1.msra.mxu0 0.0
        %2115 = vmatprep.subr.mxu0 0.0
        %2116 = vmatpush1.msra.mxu0 0.0
        %2117 = vmatprep.subr.mxu0 0.0
        %2118 = vmatpush1.msra.mxu0 0.0
        %2119 = vmatprep.subr.mxu0 0.0
        %2120 = vmatpush1.msra.mxu0 0.0
        %2121 = vmatprep.subr.mxu0 0.0
        %2122 = vmatpush1.msra.mxu0 0.0
        %2123 = vmatprep.subr.mxu0 0.0
        %2124 = vmatpush1.msra.mxu0 0.0
        %2125 = vmatprep.subr.mxu0 0.0
        %2126 = vmatpush1.msra.mxu0 0.0
        %2127 = vmatprep.subr.mxu0 0.0
        %2128 = vmatpush1.msra.mxu0 0.0
        %2129 = vmatprep.subr.mxu0 0.0
        %2130 = vmatpush1.msra.mxu0 0.0
        %2131 = vmatprep.subr.mxu0 0.0
        %2132 = vmatpush1.msra.mxu0 0.0
        %2133 = vmatprep.subr.mxu0 0.0
        %2134 = vmatpush1.msra.mxu0 0.0
        %2135 = vmatprep.subr.mxu0 0.0
        %2136 = vmatpush1.msra.mxu0 0.0
        %2137 = vmatprep.subr.mxu0 0.0
        %2138 = vmatpush1.msra.mxu0 0.0
        %2139 = vmatprep.subr.mxu0 0.0
        %2140 = vmatpush1.msra.mxu0 0.0
        %2141 = vmatprep.subr.mxu0 0.0
        %2142 = vmatpush1.msra.mxu0 0.0
        %2143 = vmatprep.subr.mxu0 0.0
        %2144 = vmatpush1.msra.mxu0 0.0
        %2145 = vmatprep.subr.mxu0 0.0
        %2146 = vmatpush1.msra.mxu0 0.0
        %2147 = vmatprep.subr.mxu0 0.0
        %2148 = vmatpush1.msra.mxu0 0.0
        %2149 = vmatprep.subr.mxu0 0.0
        %2150 = vmatpush1.msra.mxu0 0.0
        %2151 = vmatprep.subr.mxu0 0.0
        %2152 = vmatpush1.msra.mxu0 0.0
        %2153 = vmatprep.subr.mxu0 0.0
        %2154 = vmatpush1.msra.mxu0 0.0
        %2155 = vmatprep.subr.mxu0 0.0
        %2156 = vmatpush1.msra.mxu0 0.0
        %2157 = vmatprep.mubr.f32.mxu0 0.0
        %v2158 = vand.u32 %v627, 4294901760
        %2159 = vmatmul.mubr.f32.gmra.mrb[0].mxu0 %v2158
        %v2160 = vpop.f32.mrb[0].mxu0
        %v2161 = vadd.f32 %v2066, %v2160
        %v2162 = vpop.f32.mrb[0].mxu0
        %2163 = vdwg.mxu0
        %2164 = vmatprep.subr.mxu0 0.0
        %v2165 = vand.u32 %v1693, 4294901760
        %2166 = vmatpush1.msra.mxu0 %v2165
        %2167 = vmatprep.subr.mxu0 0.0
        %v2168 = vand.u32 %v1694, 4294901760
        %2169 = vmatpush1.msra.mxu0 %v2168
        %2170 = vmatprep.subr.mxu0 0.0
        %v2171 = vand.u32 %v1695, 4294901760
        %2172 = vmatpush1.msra.mxu0 %v2171
        %2173 = vmatprep.subr.mxu0 0.0
        %v2174 = vand.u32 %v1696, 4294901760
        %2175 = vmatpush1.msra.mxu0 %v2174
        %2176 = vmatprep.subr.mxu0 0.0
        %v2177 = vand.u32 %v1697, 4294901760
        %2178 = vmatpush1.msra.mxu0 %v2177
        %2179 = vmatprep.subr.mxu0 0.0
        %v2180 = vand.u32 %v1698, 4294901760
        %2181 = vmatpush1.msra.mxu0 %v2180
        %2182 = vmatprep.subr.mxu0 0.0
        %v2183 = vand.u32 %v1699, 4294901760
        %2184 = vmatpush1.msra.mxu0 %v2183
        %2185 = vmatprep.subr.mxu0 0.0
        %v2186 = vand.u32 %v1700, 4294901760
        %2187 = vmatpush1.msra.mxu0 %v2186
        %2188 = vmatprep.subr.mxu0 0.0
        %2189 = vmatpush1.msra.mxu0 0.0
        %2190 = vmatprep.subr.mxu0 0.0
        %2191 = vmatpush1.msra.mxu0 0.0
        %2192 = vmatprep.subr.mxu0 0.0
        %2193 = vmatpush1.msra.mxu0 0.0
        %2194 = vmatprep.subr.mxu0 0.0
        %2195 = vmatpush1.msra.mxu0 0.0
        %2196 = vmatprep.subr.mxu0 0.0
        %2197 = vmatpush1.msra.mxu0 0.0
        %2198 = vmatprep.subr.mxu0 0.0
        %2199 = vmatpush1.msra.mxu0 0.0
        %2200 = vmatprep.subr.mxu0 0.0
        %2201 = vmatpush1.msra.mxu0 0.0
        %2202 = vmatprep.subr.mxu0 0.0
        %2203 = vmatpush1.msra.mxu0 0.0
        %2204 = vmatprep.subr.mxu0 0.0
        %2205 = vmatpush1.msra.mxu0 0.0
        %2206 = vmatprep.subr.mxu0 0.0
        %2207 = vmatpush1.msra.mxu0 0.0
        %2208 = vmatprep.subr.mxu0 0.0
        %2209 = vmatpush1.msra.mxu0 0.0
        %2210 = vmatprep.subr.mxu0 0.0
        %2211 = vmatpush1.msra.mxu0 0.0
        %2212 = vmatprep.subr.mxu0 0.0
        %2213 = vmatpush1.msra.mxu0 0.0
        %2214 = vmatprep.subr.mxu0 0.0
        %2215 = vmatpush1.msra.mxu0 0.0
        %2216 = vmatprep.subr.mxu0 0.0
        %2217 = vmatpush1.msra.mxu0 0.0
        %2218 = vmatprep.subr.mxu0 0.0
        %2219 = vmatpush1.msra.mxu0 0.0
        %2220 = vmatprep.subr.mxu0 0.0
        %2221 = vmatpush1.msra.mxu0 0.0
        %2222 = vmatprep.subr.mxu0 0.0
        %2223 = vmatpush1.msra.mxu0 0.0
        %2224 = vmatprep.subr.mxu0 0.0
        %2225 = vmatpush1.msra.mxu0 0.0
        %2226 = vmatprep.subr.mxu0 0.0
        %2227 = vmatpush1.msra.mxu0 0.0
        %2228 = vmatprep.subr.mxu0 0.0
        %2229 = vmatpush1.msra.mxu0 0.0
        %2230 = vmatprep.subr.mxu0 0.0
        %2231 = vmatpush1.msra.mxu0 0.0
        %2232 = vmatprep.subr.mxu0 0.0
        %2233 = vmatpush1.msra.mxu0 0.0
        %2234 = vmatprep.subr.mxu0 0.0
        %2235 = vmatpush1.msra.mxu0 0.0
        %2236 = vmatprep.mubr.f32.mxu0 0.0
        %v2237 = vand.u32 %v627, 4294901760
        %2238 = vmatmul.mubr.f32.gmra.mrb[0].mxu0 %v2237
        %v2239 = vpop.f32.mrb[0].mxu0
        %v2240 = vadd.f32 %v2161, %v2239
        %v2241 = vpop.f32.mrb[0].mxu0
        %2242 = vdwg.mxu0
        %v2243 = vmax.f32 %v2240, 0.0
        %v2244 = vld [vmem:[#allocation2 + $0xc8] sm:$0xff]
        %v2245 = vld [vmem:[#allocation2 + $0xd0] sm:$0xff]
        %v2246 = vld [vmem:[#allocation2 + $0xd8] sm:$0x1]
        %v2247 = vlaneseq
        %v2248 = vshrl.u32 %v2247, 7
        %v2249 = vsub.s32 0, %v2248
        %v2250 = vrot.slane %v2246, %v2249
        %vm2251 = vcmask 130048
        %v2253 = vsel %vm2251, %v2243, 0
        %2255 = vmatprep.subr.mxu0 0.0
        %v2256 = vand.u32 %v2244, 4294901760
        %2257 = vmatpush1.msra.mxu0 %v2256
        %2258 = vmatprep.subr.mxu0 0.0
        %v2259 = vand.u32 %v2245, 4294901760
        %2260 = vmatpush1.msra.mxu0 %v2259
        %2261 = vmatprep.subr.mxu0 0.0
        %2262 = vmatpush1.msra.mxu0 0.0
        %2263 = vmatprep.subr.mxu0 0.0
        %2264 = vmatpush1.msra.mxu0 0.0
        %2265 = vmatprep.subr.mxu0 0.0
        %2266 = vmatpush1.msra.mxu0 0.0
        %2267 = vmatprep.subr.mxu0 0.0
        %2268 = vmatpush1.msra.mxu0 0.0
        %2269 = vmatprep.subr.mxu0 0.0
        %2270 = vmatpush1.msra.mxu0 0.0
        %2271 = vmatprep.subr.mxu0 0.0
        %2272 = vmatpush1.msra.mxu0 0.0
        %2273 = vmatprep.subr.mxu0 0.0
        %2274 = vmatpush1.msra.mxu0 0.0
        %2275 = vmatprep.subr.mxu0 0.0
        %2276 = vmatpush1.msra.mxu0 0.0
        %2277 = vmatprep.subr.mxu0 0.0
        %2278 = vmatpush1.msra.mxu0 0.0
        %2279 = vmatprep.subr.mxu0 0.0
        %2280 = vmatpush1.msra.mxu0 0.0
        %2281 = vmatprep.subr.mxu0 0.0
        %2282 = vmatpush1.msra.mxu0 0.0
        %2283 = vmatprep.subr.mxu0 0.0
        %2284 = vmatpush1.msra.mxu0 0.0
        %2285 = vmatprep.subr.mxu0 0.0
        %2286 = vmatpush1.msra.mxu0 0.0
        %2287 = vmatprep.subr.mxu0 0.0
        %2288 = vmatpush1.msra.mxu0 0.0
        %2289 = vmatprep.subr.mxu0 0.0
        %2290 = vmatpush1.msra.mxu0 0.0
        %2291 = vmatprep.subr.mxu0 0.0
        %2292 = vmatpush1.msra.mxu0 0.0
        %2293 = vmatprep.subr.mxu0 0.0
        %2294 = vmatpush1.msra.mxu0 0.0
        %2295 = vmatprep.subr.mxu0 0.0
        %2296 = vmatpush1.msra.mxu0 0.0
        %2297 = vmatprep.subr.mxu0 0.0
        %2298 = vmatpush1.msra.mxu0 0.0
        %2299 = vmatprep.subr.mxu0 0.0
        %2300 = vmatpush1.msra.mxu0 0.0
        %2301 = vmatprep.subr.mxu0 0.0
        %2302 = vmatpush1.msra.mxu0 0.0
        %2303 = vmatprep.subr.mxu0 0.0
        %2304 = vmatpush1.msra.mxu0 0.0
        %2305 = vmatprep.subr.mxu0 0.0
        %2306 = vmatpush1.msra.mxu0 0.0
        %2307 = vmatprep.subr.mxu0 0.0
        %2308 = vmatpush1.msra.mxu0 0.0
        %2309 = vmatprep.subr.mxu0 0.0
        %2310 = vmatpush1.msra.mxu0 0.0
        %2311 = vmatprep.subr.mxu0 0.0
        %2312 = vmatpush1.msra.mxu0 0.0
        %2313 = vmatprep.subr.mxu0 0.0
        %2314 = vmatpush1.msra.mxu0 0.0
        %2315 = vmatprep.subr.mxu0 0.0
        %2316 = vmatpush1.msra.mxu0 0.0
        %2317 = vmatprep.subr.mxu0 0.0
        %2318 = vmatpush1.msra.mxu0 0.0
        %2319 = vmatprep.subr.mxu0 0.0
        %2320 = vmatpush1.msra.mxu0 0.0
        %2321 = vmatprep.mubr.f32.mxu0 0.0
        %v2322 = vand.u32 %v2253, 4294901760
        %v2323 = vsub.f32 %v2253, %v2322
        %v2324 = vand.u32 %v2323, 4294901760
        %v2325 = vsub.f32 %v2323, %v2324
        %v2326 = vand.u32 %v2325, 4294901760
        %2327 = vmatmul.mubr.f32.gmra.mrb[0].mxu0 %v2326
        %v2328 = vpop.f32.mrb[0].mxu0
        %v2329 = vadd.f32 %v2250, %v2328
        %v2330 = vpop.f32.mrb[0].mxu0
        %2331 = vdwg.mxu0
        %2332 = vmatprep.subr.mxu0 0.0
        %v2333 = vand.u32 %v2244, 4294901760
        %v2334 = vsub.f32 %v2244, %v2333
        %v2335 = vand.u32 %v2334, 4294901760
        %v2336 = vsub.f32 %v2334, %v2335
        %v2337 = vand.u32 %v2336, 4294901760
        %2338 = vmatpush1.msra.mxu0 %v2337
        %2339 = vmatprep.subr.mxu0 0.0
        %v2340 = vand.u32 %v2245, 4294901760
        %v2341 = vsub.f32 %v2245, %v2340
        %v2342 = vand.u32 %v2341, 4294901760
        %v2343 = vsub.f32 %v2341, %v2342
        %v2344 = vand.u32 %v2343, 4294901760
        %2345 = vmatpush1.msra.mxu0 %v2344
        %2346 = vmatprep.subr.mxu0 0.0
        %2347 = vmatpush1.msra.mxu0 0.0
        %2348 = vmatprep.subr.mxu0 0.0
        %2349 = vmatpush1.msra.mxu0 0.0
        %2350 = vmatprep.subr.mxu0 0.0
        %2351 = vmatpush1.msra.mxu0 0.0
        %2352 = vmatprep.subr.mxu0 0.0
        %2353 = vmatpush1.msra.mxu0 0.0
        %2354 = vmatprep.subr.mxu0 0.0
        %2355 = vmatpush1.msra.mxu0 0.0
        %2356 = vmatprep.subr.mxu0 0.0
        %2357 = vmatpush1.msra.mxu0 0.0
        %2358 = vmatprep.subr.mxu0 0.0
        %2359 = vmatpush1.msra.mxu0 0.0
        %2360 = vmatprep.subr.mxu0 0.0
        %2361 = vmatpush1.msra.mxu0 0.0
        %2362 = vmatprep.subr.mxu0 0.0
        %2363 = vmatpush1.msra.mxu0 0.0
        %2364 = vmatprep.subr.mxu0 0.0
        %2365 = vmatpush1.msra.mxu0 0.0
        %2366 = vmatprep.subr.mxu0 0.0
        %2367 = vmatpush1.msra.mxu0 0.0
        %2368 = vmatprep.subr.mxu0 0.0
        %2369 = vmatpush1.msra.mxu0 0.0
        %2370 = vmatprep.subr.mxu0 0.0
        %2371 = vmatpush1.msra.mxu0 0.0
        %2372 = vmatprep.subr.mxu0 0.0
        %2373 = vmatpush1.msra.mxu0 0.0
        %2374 = vmatprep.subr.mxu0 0.0
        %2375 = vmatpush1.msra.mxu0 0.0
        %2376 = vmatprep.subr.mxu0 0.0
        %2377 = vmatpush1.msra.mxu0 0.0
        %2378 = vmatprep.subr.mxu0 0.0
        %2379 = vmatpush1.msra.mxu0 0.0
        %2380 = vmatprep.subr.mxu0 0.0
        %2381 = vmatpush1.msra.mxu0 0.0
        %2382 = vmatprep.subr.mxu0 0.0
        %2383 = vmatpush1.msra.mxu0 0.0
        %2384 = vmatprep.subr.mxu0 0.0
        %2385 = vmatpush1.msra.mxu0 0.0
        %2386 = vmatprep.subr.mxu0 0.0
        %2387 = vmatpush1.msra.mxu0 0.0
        %2388 = vmatprep.subr.mxu0 0.0
        %2389 = vmatpush1.msra.mxu0 0.0
        %2390 = vmatprep.subr.mxu0 0.0
        %2391 = vmatpush1.msra.mxu0 0.0
        %2392 = vmatprep.subr.mxu0 0.0
        %2393 = vmatpush1.msra.mxu0 0.0
        %2394 = vmatprep.subr.mxu0 0.0
        %2395 = vmatpush1.msra.mxu0 0.0
        %2396 = vmatprep.subr.mxu0 0.0
        %2397 = vmatpush1.msra.mxu0 0.0
        %2398 = vmatprep.subr.mxu0 0.0
        %2399 = vmatpush1.msra.mxu0 0.0
        %2400 = vmatprep.subr.mxu0 0.0
        %2401 = vmatpush1.msra.mxu0 0.0
        %2402 = vmatprep.subr.mxu0 0.0
        %2403 = vmatpush1.msra.mxu0 0.0
        %2404 = vmatprep.subr.mxu0 0.0
        %2405 = vmatpush1.msra.mxu0 0.0
        %2406 = vmatprep.mubr.f32.mxu0 0.0
        %v2407 = vand.u32 %v2253, 4294901760
        %2408 = vmatmul.mubr.f32.gmra.mrb[0].mxu0 %v2407
        %v2409 = vpop.f32.mrb[0].mxu0
        %v2410 = vadd.f32 %v2329, %v2409
        %v2411 = vpop.f32.mrb[0].mxu0
        %2412 = vdwg.mxu0
        %2413 = vmatprep.subr.mxu0 0.0
        %v2414 = vand.u32 %v2244, 4294901760
        %v2415 = vsub.f32 %v2244, %v2414
        %2416 = vmatpush1.msra.mxu0 %v2415
        %2417 = vmatprep.subr.mxu0 0.0
        %v2418 = vand.u32 %v2245, 4294901760
        %v2419 = vsub.f32 %v2245, %v2418
        %2420 = vmatpush1.msra.mxu0 %v2419
        %2421 = vmatprep.subr.mxu0 0.0
        %2422 = vmatpush1.msra.mxu0 0.0
        %2423 = vmatprep.subr.mxu0 0.0
        %2424 = vmatpush1.msra.mxu0 0.0
        %2425 = vmatprep.subr.mxu0 0.0
        %2426 = vmatpush1.msra.mxu0 0.0
        %2427 = vmatprep.subr.mxu0 0.0
        %2428 = vmatpush1.msra.mxu0 0.0
        %2429 = vmatprep.subr.mxu0 0.0
        %2430 = vmatpush1.msra.mxu0 0.0
        %2431 = vmatprep.subr.mxu0 0.0
        %2432 = vmatpush1.msra.mxu0 0.0
        %2433 = vmatprep.subr.mxu0 0.0
        %2434 = vmatpush1.msra.mxu0 0.0
        %2435 = vmatprep.subr.mxu0 0.0
        %2436 = vmatpush1.msra.mxu0 0.0
        %2437 = vmatprep.subr.mxu0 0.0
        %2438 = vmatpush1.msra.mxu0 0.0
        %2439 = vmatprep.subr.mxu0 0.0
        %2440 = vmatpush1.msra.mxu0 0.0
        %2441 = vmatprep.subr.mxu0 0.0
        %2442 = vmatpush1.msra.mxu0 0.0
        %2443 = vmatprep.subr.mxu0 0.0
        %2444 = vmatpush1.msra.mxu0 0.0
        %2445 = vmatprep.subr.mxu0 0.0
        %2446 = vmatpush1.msra.mxu0 0.0
        %2447 = vmatprep.subr.mxu0 0.0
        %2448 = vmatpush1.msra.mxu0 0.0
        %2449 = vmatprep.subr.mxu0 0.0
        %2450 = vmatpush1.msra.mxu0 0.0
        %2451 = vmatprep.subr.mxu0 0.0
        %2452 = vmatpush1.msra.mxu0 0.0
        %2453 = vmatprep.subr.mxu0 0.0
        %2454 = vmatpush1.msra.mxu0 0.0
        %2455 = vmatprep.subr.mxu0 0.0
        %2456 = vmatpush1.msra.mxu0 0.0
        %2457 = vmatprep.subr.mxu0 0.0
        %2458 = vmatpush1.msra.mxu0 0.0
        %2459 = vmatprep.subr.mxu0 0.0
        %2460 = vmatpush1.msra.mxu0 0.0
        %2461 = vmatprep.subr.mxu0 0.0
        %2462 = vmatpush1.msra.mxu0 0.0
        %2463 = vmatprep.subr.mxu0 0.0
        %2464 = vmatpush1.msra.mxu0 0.0
        %2465 = vmatprep.subr.mxu0 0.0
        %2466 = vmatpush1.msra.mxu0 0.0
        %2467 = vmatprep.subr.mxu0 0.0
        %2468 = vmatpush1.msra.mxu0 0.0
        %2469 = vmatprep.subr.mxu0 0.0
        %2470 = vmatpush1.msra.mxu0 0.0
        %2471 = vmatprep.subr.mxu0 0.0
        %2472 = vmatpush1.msra.mxu0 0.0
        %2473 = vmatprep.subr.mxu0 0.0
        %2474 = vmatpush1.msra.mxu0 0.0
        %2475 = vmatprep.subr.mxu0 0.0
        %2476 = vmatpush1.msra.mxu0 0.0
        %2477 = vmatprep.subr.mxu0 0.0
        %2478 = vmatpush1.msra.mxu0 0.0
        %2479 = vmatprep.subr.mxu0 0.0
        %2480 = vmatpush1.msra.mxu0 0.0
        %2481 = vmatprep.mubr.f32.mxu0 0.0
        %v2482 = vand.u32 %v2253, 4294901760
        %v2483 = vsub.f32 %v2253, %v2482
        %2484 = vmatmul.mubr.f32.gmra.mrb[0].mxu0 %v2483
        %v2485 = vpop.f32.mrb[0].mxu0
        %v2486 = vadd.f32 %v2410, %v2485
        %v2487 = vpop.f32.mrb[0].mxu0
        %2488 = vdwg.mxu0
        %2489 = vmatprep.subr.mxu0 0.0
        %v2490 = vand.u32 %v2244, 4294901760
        %2491 = vmatpush1.msra.mxu0 %v2490
        %2492 = vmatprep.subr.mxu0 0.0
        %v2493 = vand.u32 %v2245, 4294901760
        %2494 = vmatpush1.msra.mxu0 %v2493
        %2495 = vmatprep.subr.mxu0 0.0
        %2496 = vmatpush1.msra.mxu0 0.0
        %2497 = vmatprep.subr.mxu0 0.0
        %2498 = vmatpush1.msra.mxu0 0.0
        %2499 = vmatprep.subr.mxu0 0.0
        %2500 = vmatpush1.msra.mxu0 0.0
        %2501 = vmatprep.subr.mxu0 0.0
        %2502 = vmatpush1.msra.mxu0 0.0
        %2503 = vmatprep.subr.mxu0 0.0
        %2504 = vmatpush1.msra.mxu0 0.0
        %2505 = vmatprep.subr.mxu0 0.0
        %2506 = vmatpush1.msra.mxu0 0.0
        %2507 = vmatprep.subr.mxu0 0.0
        %2508 = vmatpush1.msra.mxu0 0.0
        %2509 = vmatprep.subr.mxu0 0.0
        %2510 = vmatpush1.msra.mxu0 0.0
        %2511 = vmatprep.subr.mxu0 0.0
        %2512 = vmatpush1.msra.mxu0 0.0
        %2513 = vmatprep.subr.mxu0 0.0
        %2514 = vmatpush1.msra.mxu0 0.0
        %2515 = vmatprep.subr.mxu0 0.0
        %2516 = vmatpush1.msra.mxu0 0.0
        %2517 = vmatprep.subr.mxu0 0.0
        %2518 = vmatpush1.msra.mxu0 0.0
        %2519 = vmatprep.subr.mxu0 0.0
        %2520 = vmatpush1.msra.mxu0 0.0
        %2521 = vmatprep.subr.mxu0 0.0
        %2522 = vmatpush1.msra.mxu0 0.0
        %2523 = vmatprep.subr.mxu0 0.0
        %2524 = vmatpush1.msra.mxu0 0.0
        %2525 = vmatprep.subr.mxu0 0.0
        %2526 = vmatpush1.msra.mxu0 0.0
        %2527 = vmatprep.subr.mxu0 0.0
        %2528 = vmatpush1.msra.mxu0 0.0
        %2529 = vmatprep.subr.mxu0 0.0
        %2530 = vmatpush1.msra.mxu0 0.0
        %2531 = vmatprep.subr.mxu0 0.0
        %2532 = vmatpush1.msra.mxu0 0.0
        %2533 = vmatprep.subr.mxu0 0.0
        %2534 = vmatpush1.msra.mxu0 0.0
        %2535 = vmatprep.subr.mxu0 0.0
        %2536 = vmatpush1.msra.mxu0 0.0
        %2537 = vmatprep.subr.mxu0 0.0
        %2538 = vmatpush1.msra.mxu0 0.0
        %2539 = vmatprep.subr.mxu0 0.0
        %2540 = vmatpush1.msra.mxu0 0.0
        %2541 = vmatprep.subr.mxu0 0.0
        %2542 = vmatpush1.msra.mxu0 0.0
        %2543 = vmatprep.subr.mxu0 0.0
        %2544 = vmatpush1.msra.mxu0 0.0
        %2545 = vmatprep.subr.mxu0 0.0
        %2546 = vmatpush1.msra.mxu0 0.0
        %2547 = vmatprep.subr.mxu0 0.0
        %2548 = vmatpush1.msra.mxu0 0.0
        %2549 = vmatprep.subr.mxu0 0.0
        %2550 = vmatpush1.msra.mxu0 0.0
        %2551 = vmatprep.subr.mxu0 0.0
        %2552 = vmatpush1.msra.mxu0 0.0
        %2553 = vmatprep.subr.mxu0 0.0
        %2554 = vmatpush1.msra.mxu0 0.0
        %2555 = vmatprep.mubr.f32.mxu0 0.0
        %v2556 = vand.u32 %v2253, 4294901760
        %v2557 = vsub.f32 %v2253, %v2556
        %v2558 = vand.u32 %v2557, 4294901760
        %2559 = vmatmul.mubr.f32.gmra.mrb[0].mxu0 %v2558
        %v2560 = vpop.f32.mrb[0].mxu0
        %v2561 = vadd.f32 %v2486, %v2560
        %v2562 = vpop.f32.mrb[0].mxu0
        %2563 = vdwg.mxu0
        %2564 = vmatprep.subr.mxu0 0.0
        %v2565 = vand.u32 %v2244, 4294901760
        %v2566 = vsub.f32 %v2244, %v2565
        %v2567 = vand.u32 %v2566, 4294901760
        %2568 = vmatpush1.msra.mxu0 %v2567
        %2569 = vmatprep.subr.mxu0 0.0
        %v2570 = vand.u32 %v2245, 4294901760
        %v2571 = vsub.f32 %v2245, %v2570
        %v2572 = vand.u32 %v2571, 4294901760
        %2573 = vmatpush1.msra.mxu0 %v2572
        %2574 = vmatprep.subr.mxu0 0.0
        %2575 = vmatpush1.msra.mxu0 0.0
        %2576 = vmatprep.subr.mxu0 0.0
        %2577 = vmatpush1.msra.mxu0 0.0
        %2578 = vmatprep.subr.mxu0 0.0
        %2579 = vmatpush1.msra.mxu0 0.0
        %2580 = vmatprep.subr.mxu0 0.0
        %2581 = vmatpush1.msra.mxu0 0.0
        %2582 = vmatprep.subr.mxu0 0.0
        %2583 = vmatpush1.msra.mxu0 0.0
        %2584 = vmatprep.subr.mxu0 0.0
        %2585 = vmatpush1.msra.mxu0 0.0
        %2586 = vmatprep.subr.mxu0 0.0
        %2587 = vmatpush1.msra.mxu0 0.0
        %2588 = vmatprep.subr.mxu0 0.0
        %2589 = vmatpush1.msra.mxu0 0.0
        %2590 = vmatprep.subr.mxu0 0.0
        %2591 = vmatpush1.msra.mxu0 0.0
        %2592 = vmatprep.subr.mxu0 0.0
        %2593 = vmatpush1.msra.mxu0 0.0
        %2594 = vmatprep.subr.mxu0 0.0
        %2595 = vmatpush1.msra.mxu0 0.0
        %2596 = vmatprep.subr.mxu0 0.0
        %2597 = vmatpush1.msra.mxu0 0.0
        %2598 = vmatprep.subr.mxu0 0.0
        %2599 = vmatpush1.msra.mxu0 0.0
        %2600 = vmatprep.subr.mxu0 0.0
        %2601 = vmatpush1.msra.mxu0 0.0
        %2602 = vmatprep.subr.mxu0 0.0
        %2603 = vmatpush1.msra.mxu0 0.0
        %2604 = vmatprep.subr.mxu0 0.0
        %2605 = vmatpush1.msra.mxu0 0.0
        %2606 = vmatprep.subr.mxu0 0.0
        %2607 = vmatpush1.msra.mxu0 0.0
        %2608 = vmatprep.subr.mxu0 0.0
        %2609 = vmatpush1.msra.mxu0 0.0
        %2610 = vmatprep.subr.mxu0 0.0
        %2611 = vmatpush1.msra.mxu0 0.0
        %2612 = vmatprep.subr.mxu0 0.0
        %2613 = vmatpush1.msra.mxu0 0.0
        %2614 = vmatprep.subr.mxu0 0.0
        %2615 = vmatpush1.msra.mxu0 0.0
        %2616 = vmatprep.subr.mxu0 0.0
        %2617 = vmatpush1.msra.mxu0 0.0
        %2618 = vmatprep.subr.mxu0 0.0
        %2619 = vmatpush1.msra.mxu0 0.0
        %2620 = vmatprep.subr.mxu0 0.0
        %2621 = vmatpush1.msra.mxu0 0.0
        %2622 = vmatprep.subr.mxu0 0.0
        %2623 = vmatpush1.msra.mxu0 0.0
        %2624 = vmatprep.subr.mxu0 0.0
        %2625 = vmatpush1.msra.mxu0 0.0
        %2626 = vmatprep.subr.mxu0 0.0
        %2627 = vmatpush1.msra.mxu0 0.0
        %2628 = vmatprep.subr.mxu0 0.0
        %2629 = vmatpush1.msra.mxu0 0.0
        %2630 = vmatprep.subr.mxu0 0.0
        %2631 = vmatpush1.msra.mxu0 0.0
        %2632 = vmatprep.subr.mxu0 0.0
        %2633 = vmatpush1.msra.mxu0 0.0
        %2634 = vmatprep.mubr.f32.mxu0 0.0
        %v2635 = vand.u32 %v2253, 4294901760
        %2636 = vmatmul.mubr.f32.gmra.mrb[0].mxu0 %v2635
        %v2637 = vpop.f32.mrb[0].mxu0
        %v2638 = vadd.f32 %v2561, %v2637
        %v2639 = vpop.f32.mrb[0].mxu0
        %2640 = vdwg.mxu0
        %2641 = vmatprep.subr.mxu0 0.0
        %v2642 = vand.u32 %v2244, 4294901760
        %2643 = vmatpush1.msra.mxu0 %v2642
        %2644 = vmatprep.subr.mxu0 0.0
        %v2645 = vand.u32 %v2245, 4294901760
        %2646 = vmatpush1.msra.mxu0 %v2645
        %2647 = vmatprep.subr.mxu0 0.0
        %2648 = vmatpush1.msra.mxu0 0.0
        %2649 = vmatprep.subr.mxu0 0.0
        %2650 = vmatpush1.msra.mxu0 0.0
        %2651 = vmatprep.subr.mxu0 0.0
        %2652 = vmatpush1.msra.mxu0 0.0
        %2653 = vmatprep.subr.mxu0 0.0
        %2654 = vmatpush1.msra.mxu0 0.0
        %2655 = vmatprep.subr.mxu0 0.0
        %2656 = vmatpush1.msra.mxu0 0.0
        %2657 = vmatprep.subr.mxu0 0.0
        %2658 = vmatpush1.msra.mxu0 0.0
        %2659 = vmatprep.subr.mxu0 0.0
        %2660 = vmatpush1.msra.mxu0 0.0
        %2661 = vmatprep.subr.mxu0 0.0
        %2662 = vmatpush1.msra.mxu0 0.0
        %2663 = vmatprep.subr.mxu0 0.0
        %2664 = vmatpush1.msra.mxu0 0.0
        %2665 = vmatprep.subr.mxu0 0.0
        %2666 = vmatpush1.msra.mxu0 0.0
        %2667 = vmatprep.subr.mxu0 0.0
        %2668 = vmatpush1.msra.mxu0 0.0
        %2669 = vmatprep.subr.mxu0 0.0
        %2670 = vmatpush1.msra.mxu0 0.0
        %2671 = vmatprep.subr.mxu0 0.0
        %2672 = vmatpush1.msra.mxu0 0.0
        %2673 = vmatprep.subr.mxu0 0.0
        %2674 = vmatpush1.msra.mxu0 0.0
        %2675 = vmatprep.subr.mxu0 0.0
        %2676 = vmatpush1.msra.mxu0 0.0
        %2677 = vmatprep.subr.mxu0 0.0
        %2678 = vmatpush1.msra.mxu0 0.0
        %2679 = vmatprep.subr.mxu0 0.0
        %2680 = vmatpush1.msra.mxu0 0.0
        %2681 = vmatprep.subr.mxu0 0.0
        %2682 = vmatpush1.msra.mxu0 0.0
        %2683 = vmatprep.subr.mxu0 0.0
        %2684 = vmatpush1.msra.mxu0 0.0
        %2685 = vmatprep.subr.mxu0 0.0
        %2686 = vmatpush1.msra.mxu0 0.0
        %2687 = vmatprep.subr.mxu0 0.0
        %2688 = vmatpush1.msra.mxu0 0.0
        %2689 = vmatprep.subr.mxu0 0.0
        %2690 = vmatpush1.msra.mxu0 0.0
        %2691 = vmatprep.subr.mxu0 0.0
        %2692 = vmatpush1.msra.mxu0 0.0
        %2693 = vmatprep.subr.mxu0 0.0
        %2694 = vmatpush1.msra.mxu0 0.0
        %2695 = vmatprep.subr.mxu0 0.0
        %2696 = vmatpush1.msra.mxu0 0.0
        %2697 = vmatprep.subr.mxu0 0.0
        %2698 = vmatpush1.msra.mxu0 0.0
        %2699 = vmatprep.subr.mxu0 0.0
        %2700 = vmatpush1.msra.mxu0 0.0
        %2701 = vmatprep.subr.mxu0 0.0
        %2702 = vmatpush1.msra.mxu0 0.0
        %2703 = vmatprep.subr.mxu0 0.0
        %2704 = vmatpush1.msra.mxu0 0.0
        %2705 = vmatprep.subr.mxu0 0.0
        %2706 = vmatpush1.msra.mxu0 0.0
        %2707 = vmatprep.mubr.f32.mxu0 0.0
        %v2708 = vand.u32 %v2253, 4294901760
        %2709 = vmatmul.mubr.f32.gmra.mrb[0].mxu0 %v2708
        %v2710 = vpop.f32.mrb[0].mxu0
        %v2711 = vadd.f32 %v2638, %v2710
        %v2712 = vpop.f32.mrb[0].mxu0
        %2713 = vdwg.mxu0
        %v2714 = vadd.f32 %v1692, %v2711
        %2715 = vst [vmem:[%s149] sm:$0xff] %v2714
        %s2716 = sand.u32 %s72, 1
        %s2717 = scalar_lea.sflag [#allocation4], %s2716
        %s2718 = sand.u32 %s72, 1
        %s2719 = smul.addr %s2718, 8
        %s2720 = scalar_lea.vmem [#allocation5], %s2719
        // Predicated region
        $region33: #{tpu_custom_call.1} parent=27 // pred_check
          %p2721 = pneg %p82
        $region34: #{tpu_custom_call.1} parent=27 // pred_check_branch
          %2723 = sbr.rel (%p2721) target = $region36
        $region35: #{tpu_custom_call.1} parent=27 // pred_region
          %s2725 = ssub.s32 128, 128
          %2726 = vsyncadd %s2717, %s2725
          %s2727 = smul.addr %s17, 128
          %s2728 = scalar_lea.hbm %s2, %s2727
          %s2730 = sshll.u32 %s2720, 4
          %s2731 = int_to_ptr.vmem [resolvable:$true] %s2730
          %2733 = dma.vmem_to_hbm [thread:$0]  %s2731, 128, %s2728, %s2717
        $region36: #{tpu_custom_call.1} parent=27 // pred_fallthru
          _
      $region28: #{tpu_custom_call.1} parent=5 // pred_fallthru
        _
      %p2734 = scmp.le.s32.totalorder 2, %s12
      // Predicated region
      $region37: #{tpu_custom_call.1} parent=5 // pred_check
        %p2735 = pneg %p2734
      $region38: #{tpu_custom_call.1} parent=5 // pred_check_branch
        %2737 = sbr.rel (%p2735) target = $region40
      $region39: #{tpu_custom_call.1} parent=5 // pred_region
        %s2738 = ssub.s32 %s12, 2
        // Predicated region
        $region41: #{tpu_custom_call.1} parent=39 // pred_check
          %p2739 = pneg %p88
        $region42: #{tpu_custom_call.1} parent=39 // pred_check_branch
          %2741 = sbr.rel (%p2739) target = $region44
        $region43: #{tpu_custom_call.1} parent=39 // pred_region
          %s2742 = sand.u32 %s73, 1
          %s2743 = scalar_lea.sflag [#allocation4], %s2742
          %s2744 = sand.u32 %s73, 1
          %s2745 = smul.addr %s2744, 8
          %s2746 = scalar_lea.vmem [#allocation5], %s2745
          %2747 = dma.done %s2743, 128
        $region44: #{tpu_custom_call.1} parent=39 // pred_fallthru
          _
      $region40: #{tpu_custom_call.1} parent=5 // pred_fallthru
        _
    $region6: #{tpu_custom_call.1} parent=1 // loop_footer
      %s16 = sadd.s32 1, %s12
    $region7: #{tpu_custom_call.1} parent=1 // loop_footer_branch
      %11 = sbr.rel target = $region3
    $region8: #{tpu_custom_call.1} parent=1 // loop_exit
      _
    %2748 = vsyncpa [#allocation3], 1
    %s2749 = scalar_lea.sflag [#allocation3], 1
    %2750 = vsyncpa %s2749, 1
    %2751 = vsyncpa [#allocation4], 1
    %s2752 = scalar_lea.sflag [#allocation4], 1
    %2753 = vsyncpa %s2752, 1

</llo_original>
